<compile_context>
chip_gen: v6e
topology: v6e:2x2x1
jax: 0.10.0
libtpu: 0.0.40
codegen_flags: <defaults>
</compile_context>

<pallas_src>
import functools

import jax
import jax.numpy as jnp
from jax.experimental import pallas as pl
from jax.experimental.pallas import tpu as pltpu

_SCAN_CHUNK = 8      # timesteps per scan chunk (one full sublane tile per store)
_HALO = 8            # conv halo rows carried between sequence tiles (>= d_conv - 1)
_D_TILE_DEFAULT = 512


# ----------------------------------------------------------------------------
# in-kernel activation helpers
# ----------------------------------------------------------------------------
def _silu(z):
    # z * sigmoid(z); reciprocal routed to the EUP slot
    return z * pl.reciprocal(1.0 + jnp.exp(-z), approx=True)


def _softplus(z):
    # numerically stable softplus
    return jnp.maximum(z, 0.0) + jnp.log1p(jnp.exp(-jnp.abs(z)))


# ----------------------------------------------------------------------------
# Pallas kernel: one (batch element, sequence tile) block of the MambaBlock fwd
# ----------------------------------------------------------------------------
def _mamba_kernel(x_ref,          # (LT, d_model)             f32
                  w_in_ref,       # (d_model, 2*d_inner)      bf16
                  b_in_ref,       # (1, 2*d_inner)            f32
                  conv_w_ref,     # (K, d_inner)              f32
                  conv_b_ref,     # (1, d_inner)              f32
                  w_dbc_ref,      # (d_inner, 3*d_state)      bf16  (delta_low | B | C)
                  b_dbc_ref,      # (1, 3*d_state)            f32
                  w_dt_ref,       # (d_state, d_inner)        f32   (dt_proj, kept f32: tiny GEMM)
                  b_dt_ref,       # (1, d_inner)              f32
                  a_ref,          # (d_state, d_inner)        f32   == (-exp(A_log)).T  (host precomputed)
                  d_ref,          # (1, d_inner)              f32   == D
                  w_out_ref,      # (d_inner, d_model)        bf16
                  b_out_ref,      # (1, d_model)              f32
                  o_ref,          # (LT, d_model)             f32
                  xin_s,          # VMEM (LT+8, d_inner)      f32   conv input + 8-row halo
                  xact_s,         # VMEM (LT, d_inner)        f32
                  delta_s,        # VMEM (LT, d_inner)        f32
                  bct_s,          # VMEM (n_chunks*2*d_state, 8) f32  chunk-blocked B|C transposed
                  g_s,            # VMEM (LT, d_inner)        f32   gate -> gated y
                  h_s,            # VMEM (d_state, d_inner)   f32   scan state carried across l-tiles
                  *, d_tile):
    LT = x_ref.shape[0]
    d_inner = d_ref.shape[1]
    d_state = a_ref.shape[0]
    K = conv_w_ref.shape[0]
    CH = _SCAN_CHUNK
    n_chunks = LT // CH
    n_dt = d_inner // d_tile
    li = pl.program_id(1)

    # ---- per-sequence carried state: zero at the first l-tile, else shift the conv halo ----
    @pl.when(li == 0)
    def _():
        h_s[...] = jnp.zeros_like(h_s)
        xin_s[0:_HALO, :] = jnp.zeros((_HALO, d_inner), jnp.float32)

    @pl.when(li > 0)
    def _():
        # last 8 pre-activation rows of the previous tile become the causal halo
        xin_s[0:_HALO, :] = xin_s[LT:LT + _HALO, :]

    # ---- in_proj: bf16 operands on the MXU, f32 accumulation ----
    xr = jnp.dot(x_ref[...].astype(jnp.bfloat16), w_in_ref[...],
                 preferred_element_type=jnp.float32) + b_in_ref[...]      # (LT, 2*d_inner)
    x_in = xr[:, :d_inner]
    res = xr[:, d_inner:]
    xin_s[_HALO:_HALO + LT, :] = x_in

    # ---- depthwise causal conv1d from the halo'd slab (no concat copy) ----
    # out[t, c] = b[c] + sum_k w[k, c] * x_in[t - (K-1) + k]   (zeros before the sequence start)
    acc = jnp.zeros((LT, d_inner), jnp.float32) + conv_b_ref[...]
    for k in range(K):
        s = (K - 1) - k
        acc = acc + xin_s[_HALO - s:_HALO - s + LT, :] * conv_w_ref[k:k + 1, :]
    x_act = _silu(acc)                                                     # (LT, d_inner)
    xact_s[...] = x_act

    # ---- fused x_proj: (delta_low | B | C) in one GEMM ----
    xab = x_act.astype(jnp.bfloat16)                                       # cast once
    dbc = jnp.dot(xab, w_dbc_ref[...],
                  preferred_element_type=jnp.float32) + b_dbc_ref[...]     # (LT, 3*d_state)
    delta_low = dbc[:, :d_state]                                           # (LT, d_state)

    # hoisted chunk-blocked transpose of B|C: one small XLU transpose per 8-step chunk,
    # done once per sequence tile (outside the d_inner-tile loop); scan uses sublane reads only.
    for c in range(n_chunks):
        blk = dbc[c * CH:(c + 1) * CH, d_state:3 * d_state]                # (CH, 2*d_state)
        bct_s[c * 2 * d_state:(c + 1) * 2 * d_state, :] = blk.T            # (2*d_state, CH)

    # ---- delta = softplus(dt_proj(delta_low)) — tiny K=d_state GEMM, kept f32 ----
    delta_s[...] = _softplus(
        jnp.dot(delta_low, w_dt_ref[...], preferred_element_type=jnp.float32)
        + b_dt_ref[...])

    # ---- gate (silu(res)); slab later overwritten chunk-wise with the gated y ----
    g_s[...] = _silu(res)

    # ---- selective scan, tiled over d_inner so h stays small in vregs ----
    for dti in range(n_dt):                                                # static d_inner tiling
        c0 = dti * d_tile
        dcols = pl.ds(c0, d_tile)
        a_t = a_ref[:, dcols]                                              # (d_state, d_tile)
        d_row = d_ref[:, dcols]                                            # (1, d_tile)

        def chunk_body(c, h):
            t0 = pl.multiple_of(c * CH, CH)
            r0 = pl.multiple_of(c * 2 * d_state, 2 * d_state)
            b_blk = bct_s[pl.ds(r0, d_state), :]                           # (d_state, CH)
            c_blk = bct_s[pl.ds(r0 + d_state, d_state), :]                 # (d_state, CH)
            ys = []
            for j in range(CH):                                            # unrolled: EUP exps
                t = t0 + j                                                 # pipeline vs VPU MACs
                # stride-0 sublane-broadcast reads: row t replicated over d_state sublanes
                delta_b = delta_s[pl.ds(t, d_state, stride=0), dcols]      # (d_state, d_tile)
                x_b = xact_s[pl.ds(t, d_state, stride=0), dcols]           # (d_state, d_tile)
                dA = jnp.exp(delta_b * a_t)
                h = dA * h + (delta_b * x_b) * b_blk[:, j:j + 1]
                ys.append(jnp.sum(h * c_blk[:, j:j + 1], axis=0, keepdims=True))
            y_ch = jnp.concatenate(ys, axis=0)                             # (CH, d_tile)
            x_ch = xact_s[pl.ds(t0, CH), dcols]
            gate_ch = g_s[pl.ds(t0, CH), dcols]
            g_s[pl.ds(t0, CH), dcols] = (y_ch + x_ch * d_row) * gate_ch    # full 8-row store
            return h

        h_fin = jax.lax.fori_loop(0, n_chunks, chunk_body, h_s[:, dcols])
        h_s[:, dcols] = h_fin                                              # carry to next l-tile

    # ---- out_proj ----
    out = jnp.dot(g_s[...].astype(jnp.bfloat16), w_out_ref[...],
                  preferred_element_type=jnp.float32) + b_out_ref[...]
    o_ref[...] = out.astype(o_ref.dtype)


# ----------------------------------------------------------------------------
# Wrapper
# ----------------------------------------------------------------------------
def _vmem_limit_bytes():
    try:
        cap = int(pltpu.get_tpu_info().vmem_capacity_bytes)
    except Exception:
        cap = 64 * 1024 * 1024
    # ~85% of physical VMEM, capped at 100 MiB (v5e/v6e: ~100 MiB, v7x: ~54 MiB)
    return int(min(int(cap * 0.85), 100 * 1024 * 1024))


def mamba_block_pallas(x, kparams, *, l_tile=None, d_tile=_D_TILE_DEFAULT):
    b, l, d_model = x.shape
    d_state, d_inner = kparams[8].shape          # a_neg_t: (d_state, d_inner)
    K = kparams[2].shape[0]

    if l_tile is None:
        l_tile = l if l <= 256 else 256
    assert l % l_tile == 0, "seq_len must be a multiple of l_tile"
    assert l_tile % _SCAN_CHUNK == 0 and l_tile >= _HALO
    assert _HALO >= K - 1
    d_tile = min(d_tile, d_inner)
    assert d_inner % d_tile == 0

    n_l = l // l_tile
    n_chunks = l_tile // _SCAN_CHUNK

    x_spec = pl.BlockSpec((None, l_tile, d_model), lambda bi, li: (bi, li, 0))
    weight_specs = [pl.BlockSpec(p.shape, lambda bi, li: (0, 0)) for p in kparams]
    out_spec = pl.BlockSpec((None, l_tile, d_model), lambda bi, li: (bi, li, 0))

    scratch_shapes = [
        pltpu.VMEM((l_tile + _HALO, d_inner), jnp.float32),               # x_in + conv halo
        pltpu.VMEM((l_tile, d_inner), jnp.float32),                       # x_act
        pltpu.VMEM((l_tile, d_inner), jnp.float32),                       # delta
        pltpu.VMEM((n_chunks * 2 * d_state, _SCAN_CHUNK), jnp.float32),   # B|C chunk-transposed
        pltpu.VMEM((l_tile, d_inner), jnp.float32),                       # gate -> gated y
        pltpu.VMEM((d_state, d_inner), jnp.float32),                      # scan state h (carried)
    ]

    flops = int(
        2 * b * l * (d_model * 2 * d_inner + d_inner * 3 * d_state
                     + d_state * d_inner + d_inner * d_model)
        + 2 * K * b * l * d_inner
        + 7 * b * l * d_state * d_inner
        + 12 * b * l * d_inner)
    transcendentals = int(b * l * (d_state * d_inner + 4 * d_inner))
    bytes_accessed = int(
        x.size * 4 + b * l * d_model * 4
        + sum(int(p.size) * p.dtype.itemsize for p in kparams))

    kernel = functools.partial(_mamba_kernel, d_tile=d_tile)

    return pl.pallas_call(
        kernel,
        out_shape=jax.ShapeDtypeStruct((b, l, d_model), jnp.float32),
        grid=(b, n_l),
        in_specs=[x_spec] + weight_specs,
        out_specs=out_spec,
        scratch_shapes=scratch_shapes,
        compiler_params=pltpu.CompilerParams(
            dimension_semantics=("parallel", "arbitrary"),
            vmem_limit_bytes=_vmem_limit_bytes()),
        cost_estimate=pl.CostEstimate(flops=flops,
                                      transcendentals=transcendentals,
                                      bytes_accessed=bytes_accessed),
    )(x, *kparams)


# ----------------------------------------------------------------------------
# Deterministic parameter init (shapes as in MambaBlock.__init__)
# ----------------------------------------------------------------------------
def init_params(key, d_model, d_state, d_conv, expand):
    d_inner = expand * d_model
    ks = jax.random.split(key, 8)

    def lin(k, out_f, in_f):
        kw, kb = jax.random.split(k)
        bound = 1.0 / jnp.sqrt(jnp.float32(in_f))
        w = jax.random.uniform(kw, (out_f, in_f), jnp.float32, -bound, bound)
        bvec = jax.random.uniform(kb, (out_f,), jnp.float32, -bound, bound)
        return w, bvec

    in_w, in_b = lin(ks[0], 2 * d_inner, d_model)
    conv_w = jax.random.uniform(ks[1], (d_inner, 1, d_conv), jnp.float32, -0.5, 0.5)
    conv_b = jax.random.uniform(ks[2], (d_inner,), jnp.float32, -0.5, 0.5)
    xp_w, xp_b = lin(ks[3], 3 * d_state, d_inner)
    dt_w, dt_b = lin(ks[4], d_inner, d_state)
    a_log = jnp.tile(jnp.log(jnp.arange(1, d_state + 1, dtype=jnp.float32)),
                     (d_inner, 1))
    d_par = jnp.ones((d_inner,), jnp.float32)
    out_w, out_b = lin(ks[5], d_model, d_inner)

    return dict(in_proj_w=in_w, in_proj_b=in_b,
                conv_w=conv_w, conv_b=conv_b,
                x_proj_w=xp_w, x_proj_b=xp_b,
                dt_proj_w=dt_w, dt_proj_b=dt_b,
                A_log=a_log, D=d_par,
                out_proj_w=out_w, out_proj_b=out_b)


def pack_kernel_params(p):
    """Transpose Linear weights for x@W, precompute A = -exp(A_log) on the host,
    and cast the large GEMM weights to bf16 (f32 accumulation happens in-kernel)."""
    bf16 = jnp.bfloat16
    a_neg_t = (-jnp.exp(p["A_log"])).T                       # (d_state, d_inner)
    return (
        p["in_proj_w"].T.astype(bf16), p["in_proj_b"][None, :],
        p["conv_w"][:, 0, :].T, p["conv_b"][None, :],
        p["x_proj_w"].T.astype(bf16), p["x_proj_b"][None, :],   # (delta_low | B | C)
        p["dt_proj_w"].T, p["dt_proj_b"][None, :],              # tiny GEMM, kept f32
        a_neg_t, p["D"][None, :],
        p["out_proj_w"].T.astype(bf16), p["out_proj_b"][None, :],
    )


# ----------------------------------------------------------------------------
# Pure-JAX f32 reference (intended Mamba semantics) for validation
# ----------------------------------------------------------------------------
def _silu_ref(z):
    return z * jax.nn.sigmoid(z)


def mamba_block_ref(x, p):
    d_inner = p["D"].shape[0]
    d_state = p["A_log"].shape[1]
    K = p["conv_w"].shape[-1]
    b, l, _ = x.shape

    xr = x @ p["in_proj_w"].T + p["in_proj_b"]
    x_in, res = xr[..., :d_inner], xr[..., d_inner:]

    x_pad = jnp.concatenate([jnp.zeros((b, K - 1, d_inner), jnp.float32), x_in], axis=1)
    w_dw = p["conv_w"][:, 0, :]                                       # (d_inner, K)
    conv = jnp.zeros((b, l, d_inner), jnp.float32)
    for k in range(K):
        conv = conv + x_pad[:, k:k + l, :] * w_dw[:, k][None, None, :]
    conv = conv + p["conv_b"][None, None, :]
    x_act = _silu_ref(conv)

    xp = x_act @ p["x_proj_w"].T + p["x_proj_b"]
    delta_raw = xp[..., :d_state]
    Bm = xp[..., d_state:2 * d_state]
    Cm = xp[..., 2 * d_state:]
    delta = jax.nn.softplus(delta_raw @ p["dt_proj_w"].T + p["dt_proj_b"])

    A = -jnp.exp(p["A_log"])                                          # (d_inner, d_state)
    dA = jnp.exp(delta[..., None] * A[None, None])
    dBx = delta[..., None] * Bm[:, :, None, :] * x_act[..., None]

    h = jnp.zeros((b, d_inner, d_state), jnp.float32)
    ys = []
    for i in range(l):
        h = dA[:, i] * h + dBx[:, i]
        ys.append(jnp.sum(h * Cm[:, i][:, None, :], axis=-1))
    y = jnp.stack(ys, axis=1) + x_act * p["D"][None, None, :]

    out = (y * _silu_ref(res)) @ p["out_proj_w"].T + p["out_proj_b"]
    return out


# ----------------------------------------------------------------------------
if __name__ == "__main__":
    d_model, d_state, d_conv, expand = 16, 16, 4, 2
    batch, seq = 2, 32                      # two sequence tiles of 16 -> exercises h / halo carry

    key = jax.random.PRNGKey(0)
    kx, kp = jax.random.split(key)
    x = jax.random.normal(kx, (batch, seq, d_model), jnp.float32)

    raw_params = init_params(kp, d_model, d_state, d_conv, expand)
    kernel_params = pack_kernel_params(raw_params)

    out = mamba_block_pallas(x, kernel_params, l_tile=16)
    out = jax.block_until_ready(out)

    with jax.default_matmul_precision("highest"):
        ref = mamba_block_ref(x, raw_params)
    ref = jax.block_until_ready(ref)

    max_err = float(jnp.max(jnp.abs(out - ref)))
    assert out.shape == (batch, seq, d_model)
    # kernel runs its large GEMMs in bf16 (f32 accumulation); allow bf16-level tolerance
    assert max_err < 5e-2, f"max abs err {max_err}"
    print("KERNEL_OK")
</pallas_src>

<mosaic_0001>
module attributes {stable_mosaic.version = 11 : i64} {
  func.func @_mamba_kernel(%arg0: i32, %arg1: i32, %arg2: memref<1x16x16xf32, #tpu.memory_space<vmem>>, %arg3: memref<16x64xbf16, #tpu.memory_space<vmem>>, %arg4: memref<1x64xf32, #tpu.memory_space<vmem>>, %arg5: memref<4x32xf32, #tpu.memory_space<vmem>>, %arg6: memref<1x32xf32, #tpu.memory_space<vmem>>, %arg7: memref<32x48xbf16, #tpu.memory_space<vmem>>, %arg8: memref<1x48xf32, #tpu.memory_space<vmem>>, %arg9: memref<16x32xf32, #tpu.memory_space<vmem>>, %arg10: memref<1x32xf32, #tpu.memory_space<vmem>>, %arg11: memref<16x32xf32, #tpu.memory_space<vmem>>, %arg12: memref<1x32xf32, #tpu.memory_space<vmem>>, %arg13: memref<32x16xbf16, #tpu.memory_space<vmem>>, %arg14: memref<1x16xf32, #tpu.memory_space<vmem>>, %arg15: memref<1x16x16xf32, #tpu.memory_space<vmem>>, %arg16: memref<24x32xf32, #tpu.memory_space<vmem>>, %arg17: memref<16x32xf32, #tpu.memory_space<vmem>>, %arg18: memref<16x32xf32, #tpu.memory_space<vmem>>, %arg19: memref<64x8xf32, #tpu.memory_space<vmem>>, %arg20: memref<16x32xf32, #tpu.memory_space<vmem>>, %arg21: memref<16x32xf32, #tpu.memory_space<vmem>>) attributes {dimension_semantics = [#tpu.dimension_semantics<parallel>, #tpu.dimension_semantics<arbitrary>], iteration_bounds = array<i64: 2, 2>, scalar_prefetch = 0 : i64, scratch_operands = 6 : i64, tpu.core_type = #tpu.core_type<tc>, window_params = [{transform_indices = @transform_0, window_bounds = array<i64: 1, 16, 16>}, {pipeline_mode = #tpu.pipeline_mode<synchronous>, transform_indices = @transform_1, window_bounds = array<i64: 16, 64>}, {pipeline_mode = #tpu.pipeline_mode<synchronous>, transform_indices = @transform_2, window_bounds = array<i64: 1, 64>}, {pipeline_mode = #tpu.pipeline_mode<synchronous>, transform_indices = @transform_3, window_bounds = array<i64: 4, 32>}, {pipeline_mode = #tpu.pipeline_mode<synchronous>, transform_indices = @transform_4, window_bounds = array<i64: 1, 32>}, {pipeline_mode = #tpu.pipeline_mode<synchronous>, transform_indices = @transform_5, window_bounds = array<i64: 32, 48>}, {pipeline_mode = #tpu.pipeline_mode<synchronous>, transform_indices = @transform_6, window_bounds = array<i64: 1, 48>}, {pipeline_mode = #tpu.pipeline_mode<synchronous>, transform_indices = @transform_7, window_bounds = array<i64: 16, 32>}, {pipeline_mode = #tpu.pipeline_mode<synchronous>, transform_indices = @transform_8, window_bounds = array<i64: 1, 32>}, {pipeline_mode = #tpu.pipeline_mode<synchronous>, transform_indices = @transform_9, window_bounds = array<i64: 16, 32>}, {pipeline_mode = #tpu.pipeline_mode<synchronous>, transform_indices = @transform_10, window_bounds = array<i64: 1, 32>}, {pipeline_mode = #tpu.pipeline_mode<synchronous>, transform_indices = @transform_11, window_bounds = array<i64: 32, 16>}, {pipeline_mode = #tpu.pipeline_mode<synchronous>, transform_indices = @transform_12, window_bounds = array<i64: 1, 16>}, {transform_indices = @transform_13, window_bounds = array<i64: 1, 16, 16>}]} {
    %c0_i32 = arith.constant 0 : i32
    %0 = arith.cmpi eq, %arg1, %c0_i32 : i32
    %1 = arith.extui %0 : i1 to i32
    %c0_i32_0 = arith.constant 0 : i32
    %2 = arith.cmpi ne, %1, %c0_i32_0 : i32
    scf.if %2 {
      %cst_68 = arith.constant 0.000000e+00 : f32
      %100 = vector.broadcast %cst_68 : f32 to vector<16x32xf32>
      %c0_69 = arith.constant 0 : index
      %c0_70 = arith.constant 0 : index
      %101 = vector.load %arg21[%c0_69, %c0_70] : memref<16x32xf32, #tpu.memory_space<vmem>>, vector<16x32xf32>
      tpu.vector_store %arg21[%c0_69, %c0_70], %100 {strides = array<i32>} : memref<16x32xf32, #tpu.memory_space<vmem>>, vector<16x32xf32>,
      %cst_71 = arith.constant 0.000000e+00 : f32
      %102 = vector.broadcast %cst_71 : f32 to vector<8x32xf32>
      %c0_72 = arith.constant 0 : index
      %c0_73 = arith.constant 0 : index
      %103 = vector.load %arg16[%c0_72, %c0_73] : memref<24x32xf32, #tpu.memory_space<vmem>>, vector<8x32xf32>
      tpu.vector_store %arg16[%c0_72, %c0_73], %102 {strides = array<i32>} : memref<24x32xf32, #tpu.memory_space<vmem>>, vector<8x32xf32>,
    } else {
    }
    %c0_i32_1 = arith.constant 0 : i32
    %3 = arith.cmpi sgt, %arg1, %c0_i32_1 : i32
    %4 = arith.extui %3 : i1 to i32
    %c0_i32_2 = arith.constant 0 : i32
    %5 = arith.cmpi ne, %4, %c0_i32_2 : i32
    scf.if %5 {
      %c16 = arith.constant 16 : index
      %c0_68 = arith.constant 0 : index
      %100 = vector.load %arg16[%c16, %c0_68] : memref<24x32xf32, #tpu.memory_space<vmem>>, vector<8x32xf32>
      %c0_69 = arith.constant 0 : index
      %c0_70 = arith.constant 0 : index
      %101 = vector.load %arg16[%c0_69, %c0_70] : memref<24x32xf32, #tpu.memory_space<vmem>>, vector<8x32xf32>
      tpu.vector_store %arg16[%c0_69, %c0_70], %100 {strides = array<i32>} : memref<24x32xf32, #tpu.memory_space<vmem>>, vector<8x32xf32>,
    } else {
    }
    %c0 = arith.constant 0 : index
    %c0_3 = arith.constant 0 : index
    %c0_4 = arith.constant 0 : index
    %6 = vector.load %arg2[%c0, %c0_3, %c0_4] : memref<1x16x16xf32, #tpu.memory_space<vmem>>, vector<1x16x16xf32>
    %7 = vector.shape_cast %6 : vector<1x16x16xf32> to vector<16x16xf32>
    %8 = arith.truncf %7 : vector<16x16xf32> to vector<16x16xbf16>
    %c0_5 = arith.constant 0 : index
    %c0_6 = arith.constant 0 : index
    %9 = vector.load %arg3[%c0_5, %c0_6] : memref<16x64xbf16, #tpu.memory_space<vmem>>, vector<16x64xbf16>
    %cst = arith.constant dense<0.000000e+00> : vector<16x64xf32>
    %10 = tpu.matmul %8, %9, %cst {dimension_numbers = #tpu.dot_dimension_numbers<[1], [0], [0], [1], [0, 0, 1, 1], [], []>} : vector<16x16xbf16>, vector<16x64xbf16>, vector<16x64xf32> -> vector<16x64xf32>
    %c0_7 = arith.constant 0 : index
    %c0_8 = arith.constant 0 : index
    %11 = vector.load %arg4[%c0_7, %c0_8] : memref<1x64xf32, #tpu.memory_space<vmem>>, vector<1x64xf32>
    %12 = vector.broadcast %11 : vector<1x64xf32> to vector<16x64xf32>
    %13 = arith.addf %10, %12 : vector<16x64xf32>
    %14 = vector.extract_strided_slice %13 {offsets = [0, 0], sizes = [16, 32], strides = [1, 1]} : vector<16x64xf32> to vector<16x32xf32>
    %15 = vector.extract_strided_slice %13 {offsets = [0, 32], sizes = [16, 32], strides = [1, 1]} : vector<16x64xf32> to vector<16x32xf32>
    %c8 = arith.constant 8 : index
    %c0_9 = arith.constant 0 : index
    %16 = vector.load %arg16[%c8, %c0_9] : memref<24x32xf32, #tpu.memory_space<vmem>>, vector<16x32xf32>
    tpu.vector_store %arg16[%c8, %c0_9], %14 {strides = array<i32>} : memref<24x32xf32, #tpu.memory_space<vmem>>, vector<16x32xf32>,
    %cst_10 = arith.constant 0.000000e+00 : f32
    %17 = vector.broadcast %cst_10 : f32 to vector<16x32xf32>
    %c0_11 = arith.constant 0 : index
    %c0_12 = arith.constant 0 : index
    %18 = vector.load %arg6[%c0_11, %c0_12] : memref<1x32xf32, #tpu.memory_space<vmem>>, vector<1x32xf32>
    %19 = vector.broadcast %18 : vector<1x32xf32> to vector<16x32xf32>
    %20 = arith.addf %17, %19 : vector<16x32xf32>
    %c5 = arith.constant 5 : index
    %c0_13 = arith.constant 0 : index
    %21 = vector.load %arg16[%c5, %c0_13] : memref<24x32xf32, #tpu.memory_space<vmem>>, vector<16x32xf32>
    %c0_14 = arith.constant 0 : index
    %c0_15 = arith.constant 0 : index
    %22 = vector.load %arg5[%c0_14, %c0_15] : memref<4x32xf32, #tpu.memory_space<vmem>>, vector<1x32xf32>
    %23 = vector.broadcast %22 : vector<1x32xf32> to vector<16x32xf32>
    %24 = arith.mulf %21, %23 : vector<16x32xf32>
    %25 = arith.addf %20, %24 : vector<16x32xf32>
    %c6 = arith.constant 6 : index
    %c0_16 = arith.constant 0 : index
    %26 = vector.load %arg16[%c6, %c0_16] : memref<24x32xf32, #tpu.memory_space<vmem>>, vector<16x32xf32>
    %c1 = arith.constant 1 : index
    %c0_17 = arith.constant 0 : index
    %27 = vector.load %arg5[%c1, %c0_17] : memref<4x32xf32, #tpu.memory_space<vmem>>, vector<1x32xf32>
    %28 = vector.broadcast %27 : vector<1x32xf32> to vector<16x32xf32>
    %29 = arith.mulf %26, %28 : vector<16x32xf32>
    %30 = arith.addf %25, %29 : vector<16x32xf32>
    %c7 = arith.constant 7 : index
    %c0_18 = arith.constant 0 : index
    %31 = vector.load %arg16[%c7, %c0_18] : memref<24x32xf32, #tpu.memory_space<vmem>>, vector<16x32xf32>
    %c2 = arith.constant 2 : index
    %c0_19 = arith.constant 0 : index
    %32 = vector.load %arg5[%c2, %c0_19] : memref<4x32xf32, #tpu.memory_space<vmem>>, vector<1x32xf32>
    %33 = vector.broadcast %32 : vector<1x32xf32> to vector<16x32xf32>
    %34 = arith.mulf %31, %33 : vector<16x32xf32>
    %35 = arith.addf %30, %34 : vector<16x32xf32>
    %c8_20 = arith.constant 8 : index
    %c0_21 = arith.constant 0 : index
    %36 = vector.load %arg16[%c8_20, %c0_21] : memref<24x32xf32, #tpu.memory_space<vmem>>, vector<16x32xf32>
    %c3 = arith.constant 3 : index
    %c0_22 = arith.constant 0 : index
    %37 = vector.load %arg5[%c3, %c0_22] : memref<4x32xf32, #tpu.memory_space<vmem>>, vector<1x32xf32>
    %38 = vector.broadcast %37 : vector<1x32xf32> to vector<16x32xf32>
    %39 = arith.mulf %36, %38 : vector<16x32xf32>
    %40 = arith.addf %35, %39 : vector<16x32xf32>
    %cst_23 = arith.constant 0.000000e+00 : f32
    %41 = vector.broadcast %cst_23 : f32 to vector<16x32xf32>
    %42 = arith.subf %41, %40 : vector<16x32xf32>
    %43 = math.exp %42 : vector<16x32xf32>
    %cst_24 = arith.constant 1.000000e+00 : f32
    %44 = vector.broadcast %cst_24 : f32 to vector<16x32xf32>
    %45 = arith.addf %44, %43 : vector<16x32xf32>
    %46 = tpu.reciprocal %45 {approx = true} : vector<16x32xf32> -> vector<16x32xf32>
    %47 = arith.mulf %40, %46 : vector<16x32xf32>
    %c0_25 = arith.constant 0 : index
    %c0_26 = arith.constant 0 : index
    %48 = vector.load %arg17[%c0_25, %c0_26] : memref<16x32xf32, #tpu.memory_space<vmem>>, vector<16x32xf32>
    tpu.vector_store %arg17[%c0_25, %c0_26], %47 {strides = array<i32>} : memref<16x32xf32, #tpu.memory_space<vmem>>, vector<16x32xf32>,
    %49 = arith.truncf %47 : vector<16x32xf32> to vector<16x32xbf16>
    %c0_27 = arith.constant 0 : index
    %c0_28 = arith.constant 0 : index
    %50 = vector.load %arg7[%c0_27, %c0_28] : memref<32x48xbf16, #tpu.memory_space<vmem>>, vector<32x48xbf16>
    %cst_29 = arith.constant dense<0.000000e+00> : vector<16x48xf32>
    %51 = tpu.matmul %49, %50, %cst_29 {dimension_numbers = #tpu.dot_dimension_numbers<[1], [0], [0], [1], [0, 0, 1, 1], [], []>} : vector<16x32xbf16>, vector<32x48xbf16>, vector<16x48xf32> -> vector<16x48xf32>
    %c0_30 = arith.constant 0 : index
    %c0_31 = arith.constant 0 : index
    %52 = vector.load %arg8[%c0_30, %c0_31] : memref<1x48xf32, #tpu.memory_space<vmem>>, vector<1x48xf32>
    %53 = vector.broadcast %52 : vector<1x48xf32> to vector<16x48xf32>
    %54 = arith.addf %51, %53 : vector<16x48xf32>
    %55 = vector.extract_strided_slice %54 {offsets = [0, 0], sizes = [16, 16], strides = [1, 1]} : vector<16x48xf32> to vector<16x16xf32>
    %56 = vector.extract_strided_slice %54 {offsets = [0, 16], sizes = [8, 32], strides = [1, 1]} : vector<16x48xf32> to vector<8x32xf32>
    %57 = tpu.transpose %56, [1, 0] : vector<8x32xf32> -> vector<32x8xf32>
    %c0_32 = arith.constant 0 : index
    %c0_33 = arith.constant 0 : index
    %58 = vector.load %arg19[%c0_32, %c0_33] : memref<64x8xf32, #tpu.memory_space<vmem>>, vector<32x8xf32>
    tpu.vector_store %arg19[%c0_32, %c0_33], %57 {strides = array<i32>} : memref<64x8xf32, #tpu.memory_space<vmem>>, vector<32x8xf32>,
    %59 = vector.extract_strided_slice %54 {offsets = [8, 16], sizes = [8, 32], strides = [1, 1]} : vector<16x48xf32> to vector<8x32xf32>
    %60 = tpu.transpose %59, [1, 0] : vector<8x32xf32> -> vector<32x8xf32>
    %c32 = arith.constant 32 : index
    %c0_34 = arith.constant 0 : index
    %61 = vector.load %arg19[%c32, %c0_34] : memref<64x8xf32, #tpu.memory_space<vmem>>, vector<32x8xf32>
    tpu.vector_store %arg19[%c32, %c0_34], %60 {strides = array<i32>} : memref<64x8xf32, #tpu.memory_space<vmem>>, vector<32x8xf32>,
    %c0_35 = arith.constant 0 : index
    %c0_36 = arith.constant 0 : index
    %62 = vector.load %arg9[%c0_35, %c0_36] : memref<16x32xf32, #tpu.memory_space<vmem>>, vector<16x32xf32>
    %cst_37 = arith.constant dense<0.000000e+00> : vector<16x32xf32>
    %63 = tpu.matmul %55, %62, %cst_37 {dimension_numbers = #tpu.dot_dimension_numbers<[1], [0], [0], [1], [0, 0, 1, 1], [], []>} : vector<16x16xf32>, vector<16x32xf32>, vector<16x32xf32> -> vector<16x32xf32>
    %c0_38 = arith.constant 0 : index
    %c0_39 = arith.constant 0 : index
    %64 = vector.load %arg10[%c0_38, %c0_39] : memref<1x32xf32, #tpu.memory_space<vmem>>, vector<1x32xf32>
    %65 = vector.broadcast %64 : vector<1x32xf32> to vector<16x32xf32>
    %66 = arith.addf %63, %65 : vector<16x32xf32>
    %cst_40 = arith.constant 0.000000e+00 : f32
    %67 = vector.broadcast %cst_40 : f32 to vector<16x32xf32>
    %68 = arith.maximumf %66, %67 : vector<16x32xf32>
    %69 = math.absf %66 : vector<16x32xf32>
    %cst_41 = arith.constant 0.000000e+00 : f32
    %70 = vector.broadcast %cst_41 : f32 to vector<16x32xf32>
    %71 = arith.subf %70, %69 : vector<16x32xf32>
    %72 = math.exp %71 : vector<16x32xf32>
    %73 = math.log1p %72 : vector<16x32xf32>
    %74 = arith.addf %68, %73 : vector<16x32xf32>
    %c0_42 = arith.constant 0 : index
    %c0_43 = arith.constant 0 : index
    %75 = vector.load %arg18[%c0_42, %c0_43] : memref<16x32xf32, #tpu.memory_space<vmem>>, vector<16x32xf32>
    tpu.vector_store %arg18[%c0_42, %c0_43], %74 {strides = array<i32>} : memref<16x32xf32, #tpu.memory_space<vmem>>, vector<16x32xf32>,
    %cst_44 = arith.constant 0.000000e+00 : f32
    %76 = vector.broadcast %cst_44 : f32 to vector<16x32xf32>
    %77 = arith.subf %76, %15 : vector<16x32xf32>
    %78 = math.exp %77 : vector<16x32xf32>
    %cst_45 = arith.constant 1.000000e+00 : f32
    %79 = vector.broadcast %cst_45 : f32 to vector<16x32xf32>
    %80 = arith.addf %79, %78 : vector<16x32xf32>
    %81 = tpu.reciprocal %80 {approx = true} : vector<16x32xf32> -> vector<16x32xf32>
    %82 = arith.mulf %15, %81 : vector<16x32xf32>
    %c0_46 = arith.constant 0 : index
    %c0_47 = arith.constant 0 : index
    %83 = vector.load %arg20[%c0_46, %c0_47] : memref<16x32xf32, #tpu.memory_space<vmem>>, vector<16x32xf32>
    tpu.vector_store %arg20[%c0_46, %c0_47], %82 {strides = array<i32>} : memref<16x32xf32, #tpu.memory_space<vmem>>, vector<16x32xf32>,
    %c0_48 = arith.constant 0 : index
    %c0_49 = arith.constant 0 : index
    %84 = vector.load %arg11[%c0_48, %c0_49] : memref<16x32xf32, #tpu.memory_space<vmem>>, vector<16x32xf32>
    %c0_50 = arith.constant 0 : index
    %c0_51 = arith.constant 0 : index
    %85 = vector.load %arg12[%c0_50, %c0_51] : memref<1x32xf32, #tpu.memory_space<vmem>>, vector<1x32xf32>
    %c0_52 = arith.constant 0 : index
    %c0_53 = arith.constant 0 : index
    %86 = vector.load %arg21[%c0_52, %c0_53] : memref<16x32xf32, #tpu.memory_space<vmem>>, vector<16x32xf32>
    %c0_i32_54 = arith.constant 0 : i32
    %c2_i32 = arith.constant 2 : i32
    %87 = arith.addi %c0_i32_54, %c2_i32 : i32
    %c1_i32 = arith.constant 1 : i32
    %88 = scf.for %arg22 = %c0_i32_54 to %87 step %c1_i32 iter_args(%arg23 = %86) -> (vector<16x32xf32>)  : i32 {
      %c8_i32 = arith.constant 8 : i32
      %100 = arith.muli %arg22, %c8_i32 : i32
      %101 = tpu.assume_multiple %100, 8 : i32
      %c2_i32_68 = arith.constant 2 : i32
      %102 = arith.muli %arg22, %c2_i32_68 : i32
      %c16_i32 = arith.constant 16 : i32
      %103 = arith.muli %102, %c16_i32 : i32
      %104 = tpu.assume_multiple %103, 32 : i32
      %105 = arith.index_cast %104 : i32 to index
      %c0_69 = arith.constant 0 : index
      %106 = vector.load %arg19[%105, %c0_69] : memref<64x8xf32, #tpu.memory_space<vmem>>, vector<16x8xf32>
      %c16_i32_70 = arith.constant 16 : i32
      %107 = arith.addi %104, %c16_i32_70 : i32
      %108 = arith.index_cast %107 : i32 to index
      %c0_71 = arith.constant 0 : index
      %109 = vector.load %arg19[%108, %c0_71] : memref<64x8xf32, #tpu.memory_space<vmem>>, vector<16x8xf32>
      %c0_i32_72 = arith.constant 0 : i32
      %110 = arith.addi %101, %c0_i32_72 : i32
      %111 = arith.index_cast %110 : i32 to index
      %c0_73 = arith.constant 0 : index
      %112 = tpu.strided_load %arg18[%111, %c0_73] {strides = array<i32: 0, 1>} : memref<16x32xf32, #tpu.memory_space<vmem>>, vector<16x32xf32>
      %113 = arith.index_cast %110 : i32 to index
      %c0_74 = arith.constant 0 : index
      %114 = tpu.strided_load %arg17[%113, %c0_74] {strides = array<i32: 0, 1>} : memref<16x32xf32, #tpu.memory_space<vmem>>, vector<16x32xf32>
      %115 = arith.mulf %112, %84 : vector<16x32xf32>
      %116 = math.exp %115 : vector<16x32xf32>
      %117 = arith.mulf %116, %arg23 : vector<16x32xf32>
      %118 = arith.mulf %112, %114 : vector<16x32xf32>
      %119 = vector.extract_strided_slice %106 {offsets = [0, 0], sizes = [16, 1], strides = [1, 1]} : vector<16x8xf32> to vector<16x1xf32>
      %120 = vector.broadcast %119 : vector<16x1xf32> to vector<16x32xf32>
      %121 = arith.mulf %118, %120 : vector<16x32xf32>
      %122 = arith.addf %117, %121 : vector<16x32xf32>
      %123 = vector.extract_strided_slice %109 {offsets = [0, 0], sizes = [16, 1], strides = [1, 1]} : vector<16x8xf32> to vector<16x1xf32>
      %124 = vector.broadcast %123 : vector<16x1xf32> to vector<16x32xf32>
      %125 = arith.mulf %122, %124 : vector<16x32xf32>
      %cst_75 = arith.constant dense<0.000000e+00> : vector<32xf32>
      %126 = vector.multi_reduction <add>, %125, %cst_75 [0] : vector<16x32xf32> to vector<32xf32>
      %127 = vector.shape_cast %126 : vector<32xf32> to vector<1x32xf32>
      %c1_i32_76 = arith.constant 1 : i32
      %128 = arith.addi %101, %c1_i32_76 : i32
      %129 = arith.index_cast %128 : i32 to index
      %c0_77 = arith.constant 0 : index
      %130 = tpu.strided_load %arg18[%129, %c0_77] {strides = array<i32: 0, 1>} : memref<16x32xf32, #tpu.memory_space<vmem>>, vector<16x32xf32>
      %131 = arith.index_cast %128 : i32 to index
      %c0_78 = arith.constant 0 : index
      %132 = tpu.strided_load %arg17[%131, %c0_78] {strides = array<i32: 0, 1>} : memref<16x32xf32, #tpu.memory_space<vmem>>, vector<16x32xf32>
      %133 = arith.mulf %130, %84 : vector<16x32xf32>
      %134 = math.exp %133 : vector<16x32xf32>
      %135 = arith.mulf %134, %122 : vector<16x32xf32>
      %136 = arith.mulf %130, %132 : vector<16x32xf32>
      %137 = vector.extract_strided_slice %106 {offsets = [0, 1], sizes = [16, 1], strides = [1, 1]} : vector<16x8xf32> to vector<16x1xf32>
      %138 = vector.broadcast %137 : vector<16x1xf32> to vector<16x32xf32>
      %139 = arith.mulf %136, %138 : vector<16x32xf32>
      %140 = arith.addf %135, %139 : vector<16x32xf32>
      %141 = vector.extract_strided_slice %109 {offsets = [0, 1], sizes = [16, 1], strides = [1, 1]} : vector<16x8xf32> to vector<16x1xf32>
      %142 = vector.broadcast %141 : vector<16x1xf32> to vector<16x32xf32>
      %143 = arith.mulf %140, %142 : vector<16x32xf32>
      %cst_79 = arith.constant dense<0.000000e+00> : vector<32xf32>
      %144 = vector.multi_reduction <add>, %143, %cst_79 [0] : vector<16x32xf32> to vector<32xf32>
      %145 = vector.shape_cast %144 : vector<32xf32> to vector<1x32xf32>
      %c2_i32_80 = arith.constant 2 : i32
      %146 = arith.addi %101, %c2_i32_80 : i32
      %147 = arith.index_cast %146 : i32 to index
      %c0_81 = arith.constant 0 : index
      %148 = tpu.strided_load %arg18[%147, %c0_81] {strides = array<i32: 0, 1>} : memref<16x32xf32, #tpu.memory_space<vmem>>, vector<16x32xf32>
      %149 = arith.index_cast %146 : i32 to index
      %c0_82 = arith.constant 0 : index
      %150 = tpu.strided_load %arg17[%149, %c0_82] {strides = array<i32: 0, 1>} : memref<16x32xf32, #tpu.memory_space<vmem>>, vector<16x32xf32>
      %151 = arith.mulf %148, %84 : vector<16x32xf32>
      %152 = math.exp %151 : vector<16x32xf32>
      %153 = arith.mulf %152, %140 : vector<16x32xf32>
      %154 = arith.mulf %148, %150 : vector<16x32xf32>
      %155 = vector.extract_strided_slice %106 {offsets = [0, 2], sizes = [16, 1], strides = [1, 1]} : vector<16x8xf32> to vector<16x1xf32>
      %156 = vector.broadcast %155 : vector<16x1xf32> to vector<16x32xf32>
      %157 = arith.mulf %154, %156 : vector<16x32xf32>
      %158 = arith.addf %153, %157 : vector<16x32xf32>
      %159 = vector.extract_strided_slice %109 {offsets = [0, 2], sizes = [16, 1], strides = [1, 1]} : vector<16x8xf32> to vector<16x1xf32>
      %160 = vector.broadcast %159 : vector<16x1xf32> to vector<16x32xf32>
      %161 = arith.mulf %158, %160 : vector<16x32xf32>
      %cst_83 = arith.constant dense<0.000000e+00> : vector<32xf32>
      %162 = vector.multi_reduction <add>, %161, %cst_83 [0] : vector<16x32xf32> to vector<32xf32>
      %163 = vector.shape_cast %162 : vector<32xf32> to vector<1x32xf32>
      %c3_i32 = arith.constant 3 : i32
      %164 = arith.addi %101, %c3_i32 : i32
      %165 = arith.index_cast %164 : i32 to index
      %c0_84 = arith.constant 0 : index
      %166 = tpu.strided_load %arg18[%165, %c0_84] {strides = array<i32: 0, 1>} : memref<16x32xf32, #tpu.memory_space<vmem>>, vector<16x32xf32>
      %167 = arith.index_cast %164 : i32 to index
      %c0_85 = arith.constant 0 : index
      %168 = tpu.strided_load %arg17[%167, %c0_85] {strides = array<i32: 0, 1>} : memref<16x32xf32, #tpu.memory_space<vmem>>, vector<16x32xf32>
      %169 = arith.mulf %166, %84 : vector<16x32xf32>
      %170 = math.exp %169 : vector<16x32xf32>
      %171 = arith.mulf %170, %158 : vector<16x32xf32>
      %172 = arith.mulf %166, %168 : vector<16x32xf32>
      %173 = vector.extract_strided_slice %106 {offsets = [0, 3], sizes = [16, 1], strides = [1, 1]} : vector<16x8xf32> to vector<16x1xf32>
      %174 = vector.broadcast %173 : vector<16x1xf32> to vector<16x32xf32>
      %175 = arith.mulf %172, %174 : vector<16x32xf32>
      %176 = arith.addf %171, %175 : vector<16x32xf32>
      %177 = vector.extract_strided_slice %109 {offsets = [0, 3], sizes = [16, 1], strides = [1, 1]} : vector<16x8xf32> to vector<16x1xf32>
      %178 = vector.broadcast %177 : vector<16x1xf32> to vector<16x32xf32>
      %179 = arith.mulf %176, %178 : vector<16x32xf32>
      %cst_86 = arith.constant dense<0.000000e+00> : vector<32xf32>
      %180 = vector.multi_reduction <add>, %179, %cst_86 [0] : vector<16x32xf32> to vector<32xf32>
      %181 = vector.shape_cast %180 : vector<32xf32> to vector<1x32xf32>
      %c4_i32 = arith.constant 4 : i32
      %182 = arith.addi %101, %c4_i32 : i32
      %183 = arith.index_cast %182 : i32 to index
      %c0_87 = arith.constant 0 : index
      %184 = tpu.strided_load %arg18[%183, %c0_87] {strides = array<i32: 0, 1>} : memref<16x32xf32, #tpu.memory_space<vmem>>, vector<16x32xf32>
      %185 = arith.index_cast %182 : i32 to index
      %c0_88 = arith.constant 0 : index
      %186 = tpu.strided_load %arg17[%185, %c0_88] {strides = array<i32: 0, 1>} : memref<16x32xf32, #tpu.memory_space<vmem>>, vector<16x32xf32>
      %187 = arith.mulf %184, %84 : vector<16x32xf32>
      %188 = math.exp %187 : vector<16x32xf32>
      %189 = arith.mulf %188, %176 : vector<16x32xf32>
      %190 = arith.mulf %184, %186 : vector<16x32xf32>
      %191 = vector.extract_strided_slice %106 {offsets = [0, 4], sizes = [16, 1], strides = [1, 1]} : vector<16x8xf32> to vector<16x1xf32>
      %192 = vector.broadcast %191 : vector<16x1xf32> to vector<16x32xf32>
      %193 = arith.mulf %190, %192 : vector<16x32xf32>
      %194 = arith.addf %189, %193 : vector<16x32xf32>
      %195 = vector.extract_strided_slice %109 {offsets = [0, 4], sizes = [16, 1], strides = [1, 1]} : vector<16x8xf32> to vector<16x1xf32>
      %196 = vector.broadcast %195 : vector<16x1xf32> to vector<16x32xf32>
      %197 = arith.mulf %194, %196 : vector<16x32xf32>
      %cst_89 = arith.constant dense<0.000000e+00> : vector<32xf32>
      %198 = vector.multi_reduction <add>, %197, %cst_89 [0] : vector<16x32xf32> to vector<32xf32>
      %199 = vector.shape_cast %198 : vector<32xf32> to vector<1x32xf32>
      %c5_i32 = arith.constant 5 : i32
      %200 = arith.addi %101, %c5_i32 : i32
      %201 = arith.index_cast %200 : i32 to index
      %c0_90 = arith.constant 0 : index
      %202 = tpu.strided_load %arg18[%201, %c0_90] {strides = array<i32: 0, 1>} : memref<16x32xf32, #tpu.memory_space<vmem>>, vector<16x32xf32>
      %203 = arith.index_cast %200 : i32 to index
      %c0_91 = arith.constant 0 : index
      %204 = tpu.strided_load %arg17[%203, %c0_91] {strides = array<i32: 0, 1>} : memref<16x32xf32, #tpu.memory_space<vmem>>, vector<16x32xf32>
      %205 = arith.mulf %202, %84 : vector<16x32xf32>
      %206 = math.exp %205 : vector<16x32xf32>
      %207 = arith.mulf %206, %194 : vector<16x32xf32>
      %208 = arith.mulf %202, %204 : vector<16x32xf32>
      %209 = vector.extract_strided_slice %106 {offsets = [0, 5], sizes = [16, 1], strides = [1, 1]} : vector<16x8xf32> to vector<16x1xf32>
      %210 = vector.broadcast %209 : vector<16x1xf32> to vector<16x32xf32>
      %211 = arith.mulf %208, %210 : vector<16x32xf32>
      %212 = arith.addf %207, %211 : vector<16x32xf32>
      %213 = vector.extract_strided_slice %109 {offsets = [0, 5], sizes = [16, 1], strides = [1, 1]} : vector<16x8xf32> to vector<16x1xf32>
      %214 = vector.broadcast %213 : vector<16x1xf32> to vector<16x32xf32>
      %215 = arith.mulf %212, %214 : vector<16x32xf32>
      %cst_92 = arith.constant dense<0.000000e+00> : vector<32xf32>
      %216 = vector.multi_reduction <add>, %215, %cst_92 [0] : vector<16x32xf32> to vector<32xf32>
      %217 = vector.shape_cast %216 : vector<32xf32> to vector<1x32xf32>
      %c6_i32 = arith.constant 6 : i32
      %218 = arith.addi %101, %c6_i32 : i32
      %219 = arith.index_cast %218 : i32 to index
      %c0_93 = arith.constant 0 : index
      %220 = tpu.strided_load %arg18[%219, %c0_93] {strides = array<i32: 0, 1>} : memref<16x32xf32, #tpu.memory_space<vmem>>, vector<16x32xf32>
      %221 = arith.index_cast %218 : i32 to index
      %c0_94 = arith.constant 0 : index
      %222 = tpu.strided_load %arg17[%221, %c0_94] {strides = array<i32: 0, 1>} : memref<16x32xf32, #tpu.memory_space<vmem>>, vector<16x32xf32>
      %223 = arith.mulf %220, %84 : vector<16x32xf32>
      %224 = math.exp %223 : vector<16x32xf32>
      %225 = arith.mulf %224, %212 : vector<16x32xf32>
      %226 = arith.mulf %220, %222 : vector<16x32xf32>
      %227 = vector.extract_strided_slice %106 {offsets = [0, 6], sizes = [16, 1], strides = [1, 1]} : vector<16x8xf32> to vector<16x1xf32>
      %228 = vector.broadcast %227 : vector<16x1xf32> to vector<16x32xf32>
      %229 = arith.mulf %226, %228 : vector<16x32xf32>
      %230 = arith.addf %225, %229 : vector<16x32xf32>
      %231 = vector.extract_strided_slice %109 {offsets = [0, 6], sizes = [16, 1], strides = [1, 1]} : vector<16x8xf32> to vector<16x1xf32>
      %232 = vector.broadcast %231 : vector<16x1xf32> to vector<16x32xf32>
      %233 = arith.mulf %230, %232 : vector<16x32xf32>
      %cst_95 = arith.constant dense<0.000000e+00> : vector<32xf32>
      %234 = vector.multi_reduction <add>, %233, %cst_95 [0] : vector<16x32xf32> to vector<32xf32>
      %235 = vector.shape_cast %234 : vector<32xf32> to vector<1x32xf32>
      %c7_i32 = arith.constant 7 : i32
      %236 = arith.addi %101, %c7_i32 : i32
      %237 = arith.index_cast %236 : i32 to index
      %c0_96 = arith.constant 0 : index
      %238 = tpu.strided_load %arg18[%237, %c0_96] {strides = array<i32: 0, 1>} : memref<16x32xf32, #tpu.memory_space<vmem>>, vector<16x32xf32>
      %239 = arith.index_cast %236 : i32 to index
      %c0_97 = arith.constant 0 : index
      %240 = tpu.strided_load %arg17[%239, %c0_97] {strides = array<i32: 0, 1>} : memref<16x32xf32, #tpu.memory_space<vmem>>, vector<16x32xf32>
      %241 = arith.mulf %238, %84 : vector<16x32xf32>
      %242 = math.exp %241 : vector<16x32xf32>
      %243 = arith.mulf %242, %230 : vector<16x32xf32>
      %244 = arith.mulf %238, %240 : vector<16x32xf32>
      %245 = vector.extract_strided_slice %106 {offsets = [0, 7], sizes = [16, 1], strides = [1, 1]} : vector<16x8xf32> to vector<16x1xf32>
      %246 = vector.broadcast %245 : vector<16x1xf32> to vector<16x32xf32>
      %247 = arith.mulf %244, %246 : vector<16x32xf32>
      %248 = arith.addf %243, %247 : vector<16x32xf32>
      %249 = vector.extract_strided_slice %109 {offsets = [0, 7], sizes = [16, 1], strides = [1, 1]} : vector<16x8xf32> to vector<16x1xf32>
      %250 = vector.broadcast %249 : vector<16x1xf32> to vector<16x32xf32>
      %251 = arith.mulf %248, %250 : vector<16x32xf32>
      %cst_98 = arith.constant dense<0.000000e+00> : vector<32xf32>
      %252 = vector.multi_reduction <add>, %251, %cst_98 [0] : vector<16x32xf32> to vector<32xf32>
      %253 = vector.shape_cast %252 : vector<32xf32> to vector<1x32xf32>
      %254 = tpu.concatenate %127, %145, %163, %181, %199, %217, %235, %253 in 0 : vector<1x32xf32>, vector<1x32xf32>, vector<1x32xf32>, vector<1x32xf32>, vector<1x32xf32>, vector<1x32xf32>, vector<1x32xf32>, vector<1x32xf32> -> vector<8x32xf32>
      %255 = arith.index_cast %101 : i32 to index
      %c0_99 = arith.constant 0 : index
      %256 = vector.load %arg17[%255, %c0_99] : memref<16x32xf32, #tpu.memory_space<vmem>>, vector<8x32xf32>
      %257 = arith.index_cast %101 : i32 to index
      %c0_100 = arith.constant 0 : index
      %258 = vector.load %arg20[%257, %c0_100] : memref<16x32xf32, #tpu.memory_space<vmem>>, vector<8x32xf32>
      %259 = vector.broadcast %85 : vector<1x32xf32> to vector<8x32xf32>
      %260 = arith.mulf %256, %259 : vector<8x32xf32>
      %261 = arith.addf %254, %260 : vector<8x32xf32>
      %262 = arith.mulf %261, %258 : vector<8x32xf32>
      %263 = arith.index_cast %101 : i32 to index
      %c0_101 = arith.constant 0 : index
      %264 = vector.load %arg20[%263, %c0_101] : memref<16x32xf32, #tpu.memory_space<vmem>>, vector<8x32xf32>
      tpu.vector_store %arg20[%263, %c0_101], %262 {strides = array<i32>} : memref<16x32xf32, #tpu.memory_space<vmem>>, vector<8x32xf32>,
      scf.yield %248 : vector<16x32xf32>
    }
    %c2_i32_55 = arith.constant 2 : i32
    %c0_56 = arith.constant 0 : index
    %c0_57 = arith.constant 0 : index
    %89 = vector.load %arg21[%c0_56, %c0_57] : memref<16x32xf32, #tpu.memory_space<vmem>>, vector<16x32xf32>
    tpu.vector_store %arg21[%c0_56, %c0_57], %88 {strides = array<i32>} : memref<16x32xf32, #tpu.memory_space<vmem>>, vector<16x32xf32>,
    %c0_58 = arith.constant 0 : index
    %c0_59 = arith.constant 0 : index
    %90 = vector.load %arg20[%c0_58, %c0_59] : memref<16x32xf32, #tpu.memory_space<vmem>>, vector<16x32xf32>
    %91 = arith.truncf %90 : vector<16x32xf32> to vector<16x32xbf16>
    %c0_60 = arith.constant 0 : index
    %c0_61 = arith.constant 0 : index
    %92 = vector.load %arg13[%c0_60, %c0_61] : memref<32x16xbf16, #tpu.memory_space<vmem>>, vector<32x16xbf16>
    %cst_62 = arith.constant dense<0.000000e+00> : vector<16x16xf32>
    %93 = tpu.matmul %91, %92, %cst_62 {dimension_numbers = #tpu.dot_dimension_numbers<[1], [0], [0], [1], [0, 0, 1, 1], [], []>} : vector<16x32xbf16>, vector<32x16xbf16>, vector<16x16xf32> -> vector<16x16xf32>
    %c0_63 = arith.constant 0 : index
    %c0_64 = arith.constant 0 : index
    %94 = vector.load %arg14[%c0_63, %c0_64] : memref<1x16xf32, #tpu.memory_space<vmem>>, vector<1x16xf32>
    %95 = vector.broadcast %94 : vector<1x16xf32> to vector<16x16xf32>
    %96 = arith.addf %93, %95 : vector<16x16xf32>
    %c0_65 = arith.constant 0 : index
    %c0_66 = arith.constant 0 : index
    %c0_67 = arith.constant 0 : index
    %97 = vector.load %arg15[%c0_65, %c0_66, %c0_67] : memref<1x16x16xf32, #tpu.memory_space<vmem>>, vector<1x16x16xf32>
    %98 = vector.shape_cast %97 : vector<1x16x16xf32> to vector<16x16xf32>
    %99 = vector.shape_cast %96 : vector<16x16xf32> to vector<1x16x16xf32>
    tpu.vector_store %arg15[%c0_65, %c0_66, %c0_67], %99 {strides = array<i32>} : memref<1x16x16xf32, #tpu.memory_space<vmem>>, vector<1x16x16xf32>,
    return
  }
  func.func @transform_0(%arg0: i32, %arg1: i32) -> (i32, i32, i32) {
    %c0_i32 = arith.constant 0 : i32
    %c0_i32_0 = arith.constant 0 : i32
    return %arg0, %arg1, %c0_i32 : i32, i32, i32
  }
  func.func @transform_1(%arg0: i32, %arg1: i32) -> (i32, i32) {
    %c0_i32 = arith.constant 0 : i32
    %c0_i32_0 = arith.constant 0 : i32
    %c0_i32_1 = arith.constant 0 : i32
    return %c0_i32, %c0_i32_0 : i32, i32
  }
  func.func @transform_2(%arg0: i32, %arg1: i32) -> (i32, i32) {
    %c0_i32 = arith.constant 0 : i32
    %c0_i32_0 = arith.constant 0 : i32
    %c0_i32_1 = arith.constant 0 : i32
    return %c0_i32, %c0_i32_0 : i32, i32
  }
  func.func @transform_3(%arg0: i32, %arg1: i32) -> (i32, i32) {
    %c0_i32 = arith.constant 0 : i32
    %c0_i32_0 = arith.constant 0 : i32
    %c0_i32_1 = arith.constant 0 : i32
    return %c0_i32, %c0_i32_0 : i32, i32
  }
  func.func @transform_4(%arg0: i32, %arg1: i32) -> (i32, i32) {
    %c0_i32 = arith.constant 0 : i32
    %c0_i32_0 = arith.constant 0 : i32
    %c0_i32_1 = arith.constant 0 : i32
    return %c0_i32, %c0_i32_0 : i32, i32
  }
  func.func @transform_5(%arg0: i32, %arg1: i32) -> (i32, i32) {
    %c0_i32 = arith.constant 0 : i32
    %c0_i32_0 = arith.constant 0 : i32
    %c0_i32_1 = arith.constant 0 : i32
    return %c0_i32, %c0_i32_0 : i32, i32
  }
  func.func @transform_6(%arg0: i32, %arg1: i32) -> (i32, i32) {
    %c0_i32 = arith.constant 0 : i32
    %c0_i32_0 = arith.constant 0 : i32
    %c0_i32_1 = arith.constant 0 : i32
    return %c0_i32, %c0_i32_0 : i32, i32
  }
  func.func @transform_7(%arg0: i32, %arg1: i32) -> (i32, i32) {
    %c0_i32 = arith.constant 0 : i32
    %c0_i32_0 = arith.constant 0 : i32
    %c0_i32_1 = arith.constant 0 : i32
    return %c0_i32, %c0_i32_0 : i32, i32
  }
  func.func @transform_8(%arg0: i32, %arg1: i32) -> (i32, i32) {
    %c0_i32 = arith.constant 0 : i32
    %c0_i32_0 = arith.constant 0 : i32
    %c0_i32_1 = arith.constant 0 : i32
    return %c0_i32, %c0_i32_0 : i32, i32
  }
  func.func @transform_9(%arg0: i32, %arg1: i32) -> (i32, i32) {
    %c0_i32 = arith.constant 0 : i32
    %c0_i32_0 = arith.constant 0 : i32
    %c0_i32_1 = arith.constant 0 : i32
    return %c0_i32, %c0_i32_0 : i32, i32
  }
  func.func @transform_10(%arg0: i32, %arg1: i32) -> (i32, i32) {
    %c0_i32 = arith.constant 0 : i32
    %c0_i32_0 = arith.constant 0 : i32
    %c0_i32_1 = arith.constant 0 : i32
    return %c0_i32, %c0_i32_0 : i32, i32
  }
  func.func @transform_11(%arg0: i32, %arg1: i32) -> (i32, i32) {
    %c0_i32 = arith.constant 0 : i32
    %c0_i32_0 = arith.constant 0 : i32
    %c0_i32_1 = arith.constant 0 : i32
    return %c0_i32, %c0_i32_0 : i32, i32
  }
  func.func @transform_12(%arg0: i32, %arg1: i32) -> (i32, i32) {
    %c0_i32 = arith.constant 0 : i32
    %c0_i32_0 = arith.constant 0 : i32
    %c0_i32_1 = arith.constant 0 : i32
    return %c0_i32, %c0_i32_0 : i32, i32
  }
  func.func @transform_13(%arg0: i32, %arg1: i32) -> (i32, i32, i32) {
    %c0_i32 = arith.constant 0 : i32
    %c0_i32_0 = arith.constant 0 : i32
    return %arg0, %arg1, %c0_i32 : i32, i32, i32
  }
}

</mosaic_0001>

<llo_original>
// kernel: tpu_custom_call.1
$region0: #{tpu_custom_call.1}
  #allocation0 [shape = 'u32[]', space=smem, size = 0x4, offset = 0x4, fixed_abs, tag = 'smem constant byte address 0x4 - core index']
  #allocation1 [shape = 'u32[144,128]{1,0:T(1,128)}', space=vmem, size = 0x12000, scoped, tag = 'internal scratch']
  #allocation2 [shape = 'f32[24,32]{1,0:T(8,128)}', space=vmem, size = 0x3000, scoped, tag = 'scratch operand']
  #allocation3 [shape = 'f32[16,32]{1,0:T(8,128)}', space=vmem, size = 0x2000, scoped, tag = 'scratch operand']
  #allocation4 [shape = 'f32[16,32]{1,0:T(8,128)}', space=vmem, size = 0x2000, scoped, tag = 'scratch operand']
  #allocation5 [shape = 'f32[64,8]{1,0:T(8,128)}', space=vmem, size = 0x8000, scoped, tag = 'scratch operand']
  #allocation6 [shape = 'f32[16,32]{1,0:T(8,128)}', space=vmem, size = 0x2000, scoped, tag = 'scratch operand']
  #allocation7 [shape = 'f32[16,32]{1,0:T(8,128)}', space=vmem, size = 0x2000, scoped, tag = 'scratch operand']
  %s0 = inlined_call_operand.vmem [shape: f32[2,32,16], index: 0, kind: input, shape index: {}]
  %s1 = inlined_call_operand.vmem [shape: bf16[16,64], index: 1, kind: input, shape index: {}]
  %s2 = inlined_call_operand.vmem [shape: f32[1,64], index: 2, kind: input, shape index: {}]
  %s3 = inlined_call_operand.vmem [shape: f32[4,32], index: 3, kind: input, shape index: {}]
  %s4 = inlined_call_operand.vmem [shape: f32[1,32], index: 4, kind: input, shape index: {}]
  %s5 = inlined_call_operand.vmem [shape: bf16[32,48], index: 5, kind: input, shape index: {}]
  %s6 = inlined_call_operand.vmem [shape: f32[1,48], index: 6, kind: input, shape index: {}]
  %s7 = inlined_call_operand.vmem [shape: f32[16,32], index: 7, kind: input, shape index: {}]
  %s8 = inlined_call_operand.vmem [shape: f32[1,32], index: 8, kind: input, shape index: {}]
  %s9 = inlined_call_operand.vmem [shape: f32[16,32], index: 9, kind: input, shape index: {}]
  %s10 = inlined_call_operand.vmem [shape: f32[1,32], index: 10, kind: input, shape index: {}]
  %s11 = inlined_call_operand.vmem [shape: bf16[32,16], index: 11, kind: input, shape index: {}]
  %s12 = inlined_call_operand.vmem [shape: f32[1,16], index: 12, kind: input, shape index: {}]
  %s13 = inlined_call_operand.vmem [shape: f32[2,32,16], index: 13, kind: output, shape index: {}]
  %s14 = sld [smem:[#allocation0]]
  $region100: #{tpu_custom_call.1} parent=0
    _
  %s16 = ssub.s32 1, %s14
  %s17 = scalar_select 0, %s16, %s14
  loop: start=0, step=1, limit=6
  $region2: #{tpu_custom_call.1} parent=0 // loop_pre_header
    _
  $region3: #{tpu_custom_call.1} parent=0 // loop_header
    %s19 = sphi 0, %s23
    %p20 = scmp.ge.s32.totalorder %s19, 6
    %s26 = sphi 0, %s38
    %s27 = sphi 0, %s34
    %s28 = sphi 0, %s26
    %s29 = sphi 0, %s27
    %s30 = sphi 0, %s28
    %s31 = sphi 0, %s29
    %s43 = sphi 0, %s45
    %s46 = sphi 0, %s43
    %s47 = sphi 0, %s46
    %s63 = sphi 0, %s47
    %s67 = sphi 0, %s67
    %s69 = sphi 0, %s67
    %s70 = sphi 0, %s69
    %s84 = sphi 0, %s70
    %s88 = sphi 0, %s88
    %s90 = sphi 0, %s88
    %s91 = sphi 0, %s90
    %s105 = sphi 0, %s91
    %s109 = sphi 0, %s109
    %s111 = sphi 0, %s109
    %s112 = sphi 0, %s111
    %s126 = sphi 0, %s112
    %s130 = sphi 0, %s130
    %s132 = sphi 0, %s130
    %s133 = sphi 0, %s132
    %s147 = sphi 0, %s133
    %s151 = sphi 0, %s151
    %s153 = sphi 0, %s151
    %s154 = sphi 0, %s153
    %s168 = sphi 0, %s154
    %s172 = sphi 0, %s172
    %s174 = sphi 0, %s172
    %s175 = sphi 0, %s174
    %s189 = sphi 0, %s175
    %s193 = sphi 0, %s193
    %s195 = sphi 0, %s193
    %s196 = sphi 0, %s195
    %s210 = sphi 0, %s196
    %s214 = sphi 0, %s214
    %s216 = sphi 0, %s214
    %s217 = sphi 0, %s216
    %s231 = sphi 0, %s217
    %s235 = sphi 0, %s235
    %s237 = sphi 0, %s235
    %s238 = sphi 0, %s237
    %s252 = sphi 0, %s238
    %s256 = sphi 0, %s256
    %s258 = sphi 0, %s256
    %s259 = sphi 0, %s258
    %s273 = sphi 0, %s259
    %s277 = sphi 0, %s277
    %s279 = sphi 0, %s277
    %s280 = sphi 0, %s279
    %s294 = sphi 0, %s280
    %s298 = sphi 0, %s298
    %s300 = sphi 0, %s298
    %s301 = sphi 0, %s300
    %s315 = sphi 0, %s301
    %s323 = sphi 0, %s325
    %s326 = sphi 0, %s323
    %s327 = sphi 0, %s326
    %s343 = sphi 0, %s327
  $region4: #{tpu_custom_call.1} parent=0 // loop_header_branch
    %22 = sbr.rel (%p20) target = $region8
  $region5: #{tpu_custom_call.1} parent=0 // loop_body
    %s24 = ssub.s32 %s19, 1
    %s25 = ssub.s32 %s19, 2
    %s32 = sadd.s32 1, %s27
    %p33 = scmp.ge.s32.totalorder %s32, 2
    %s34 = scalar_select %p33, 0, %s32
    %s35 = sadd.s32 1, %s26
    %s36 = scalar_select %p33, %s35, %s26
    %p37 = scmp.ge.s32.totalorder %s36, 2
    %s38 = scalar_select %p37, 0, %s36
    %s39 = ssub.s32 %s26, %s38
    %s40 = ssub.s32 %s27, %s34
    %s41 = sor.u32 %s39, %s40
    %p42 = scmp.eq.s32.totalorder %s41, 0
    %s44 = sadd.s32 %s43, 1
    %s45 = scalar_select %p42, %s43, %s44
    %p48 = pneg %p42
    %p49 = scmp.eq.s32.totalorder %s19, 3
    %p50 = por %p48, %p49
    %p51 = scmp.ne.s32.totalorder %s43, %s46
    %p52 = scmp.eq.s32.totalorder %s19, 0
    %p53 = por %p51, %p52
    %p54 = scmp.ne.s32.totalorder %s43, %s46
    %p55 = scmp.eq.s32.totalorder %s24, 3
    %p56 = por %p54, %p55
    %p57 = scmp.ne.s32.totalorder %s46, %s47
    %p58 = scmp.eq.s32.totalorder %s24, 0
    %p59 = por %p57, %p58
    %p60 = scmp.ne.s32.totalorder %s46, %s47
    %p61 = scmp.eq.s32.totalorder %s25, 3
    %p62 = por %p60, %p61
    %p64 = scmp.ne.s32.totalorder %s47, %s63
    %p65 = scmp.eq.s32.totalorder %s25, 0
    %p66 = por %p64, %p65
    %s68 = sadd.s32 %s67, 1
    %p71 = scmp.eq.s32.totalorder %s19, 3
    %p72 = scmp.ne.s32.totalorder %s67, %s69
    %p73 = scmp.eq.s32.totalorder %s19, 0
    %p74 = por %p72, %p73
    %p75 = scmp.ne.s32.totalorder %s67, %s69
    %p76 = scmp.eq.s32.totalorder %s24, 3
    %p77 = por %p75, %p76
    %p78 = scmp.ne.s32.totalorder %s69, %s70
    %p79 = scmp.eq.s32.totalorder %s24, 0
    %p80 = por %p78, %p79
    %p81 = scmp.ne.s32.totalorder %s69, %s70
    %p82 = scmp.eq.s32.totalorder %s25, 3
    %p83 = por %p81, %p82
    %p85 = scmp.ne.s32.totalorder %s70, %s84
    %p86 = scmp.eq.s32.totalorder %s25, 0
    %p87 = por %p85, %p86
    %s89 = sadd.s32 %s88, 1
    %p92 = scmp.eq.s32.totalorder %s19, 3
    %p93 = scmp.ne.s32.totalorder %s88, %s90
    %p94 = scmp.eq.s32.totalorder %s19, 0
    %p95 = por %p93, %p94
    %p96 = scmp.ne.s32.totalorder %s88, %s90
    %p97 = scmp.eq.s32.totalorder %s24, 3
    %p98 = por %p96, %p97
    %p99 = scmp.ne.s32.totalorder %s90, %s91
    %p100 = scmp.eq.s32.totalorder %s24, 0
    %p101 = por %p99, %p100
    %p102 = scmp.ne.s32.totalorder %s90, %s91
    %p103 = scmp.eq.s32.totalorder %s25, 3
    %p104 = por %p102, %p103
    %p106 = scmp.ne.s32.totalorder %s91, %s105
    %p107 = scmp.eq.s32.totalorder %s25, 0
    %p108 = por %p106, %p107
    %s110 = sadd.s32 %s109, 1
    %p113 = scmp.eq.s32.totalorder %s19, 3
    %p114 = scmp.ne.s32.totalorder %s109, %s111
    %p115 = scmp.eq.s32.totalorder %s19, 0
    %p116 = por %p114, %p115
    %p117 = scmp.ne.s32.totalorder %s109, %s111
    %p118 = scmp.eq.s32.totalorder %s24, 3
    %p119 = por %p117, %p118
    %p120 = scmp.ne.s32.totalorder %s111, %s112
    %p121 = scmp.eq.s32.totalorder %s24, 0
    %p122 = por %p120, %p121
    %p123 = scmp.ne.s32.totalorder %s111, %s112
    %p124 = scmp.eq.s32.totalorder %s25, 3
    %p125 = por %p123, %p124
    %p127 = scmp.ne.s32.totalorder %s112, %s126
    %p128 = scmp.eq.s32.totalorder %s25, 0
    %p129 = por %p127, %p128
    %s131 = sadd.s32 %s130, 1
    %p134 = scmp.eq.s32.totalorder %s19, 3
    %p135 = scmp.ne.s32.totalorder %s130, %s132
    %p136 = scmp.eq.s32.totalorder %s19, 0
    %p137 = por %p135, %p136
    %p138 = scmp.ne.s32.totalorder %s130, %s132
    %p139 = scmp.eq.s32.totalorder %s24, 3
    %p140 = por %p138, %p139
    %p141 = scmp.ne.s32.totalorder %s132, %s133
    %p142 = scmp.eq.s32.totalorder %s24, 0
    %p143 = por %p141, %p142
    %p144 = scmp.ne.s32.totalorder %s132, %s133
    %p145 = scmp.eq.s32.totalorder %s25, 3
    %p146 = por %p144, %p145
    %p148 = scmp.ne.s32.totalorder %s133, %s147
    %p149 = scmp.eq.s32.totalorder %s25, 0
    %p150 = por %p148, %p149
    %s152 = sadd.s32 %s151, 1
    %p155 = scmp.eq.s32.totalorder %s19, 3
    %p156 = scmp.ne.s32.totalorder %s151, %s153
    %p157 = scmp.eq.s32.totalorder %s19, 0
    %p158 = por %p156, %p157
    %p159 = scmp.ne.s32.totalorder %s151, %s153
    %p160 = scmp.eq.s32.totalorder %s24, 3
    %p161 = por %p159, %p160
    %p162 = scmp.ne.s32.totalorder %s153, %s154
    %p163 = scmp.eq.s32.totalorder %s24, 0
    %p164 = por %p162, %p163
    %p165 = scmp.ne.s32.totalorder %s153, %s154
    %p166 = scmp.eq.s32.totalorder %s25, 3
    %p167 = por %p165, %p166
    %p169 = scmp.ne.s32.totalorder %s154, %s168
    %p170 = scmp.eq.s32.totalorder %s25, 0
    %p171 = por %p169, %p170
    %s173 = sadd.s32 %s172, 1
    %p176 = scmp.eq.s32.totalorder %s19, 3
    %p177 = scmp.ne.s32.totalorder %s172, %s174
    %p178 = scmp.eq.s32.totalorder %s19, 0
    %p179 = por %p177, %p178
    %p180 = scmp.ne.s32.totalorder %s172, %s174
    %p181 = scmp.eq.s32.totalorder %s24, 3
    %p182 = por %p180, %p181
    %p183 = scmp.ne.s32.totalorder %s174, %s175
    %p184 = scmp.eq.s32.totalorder %s24, 0
    %p185 = por %p183, %p184
    %p186 = scmp.ne.s32.totalorder %s174, %s175
    %p187 = scmp.eq.s32.totalorder %s25, 3
    %p188 = por %p186, %p187
    %p190 = scmp.ne.s32.totalorder %s175, %s189
    %p191 = scmp.eq.s32.totalorder %s25, 0
    %p192 = por %p190, %p191
    %s194 = sadd.s32 %s193, 1
    %p197 = scmp.eq.s32.totalorder %s19, 3
    %p198 = scmp.ne.s32.totalorder %s193, %s195
    %p199 = scmp.eq.s32.totalorder %s19, 0
    %p200 = por %p198, %p199
    %p201 = scmp.ne.s32.totalorder %s193, %s195
    %p202 = scmp.eq.s32.totalorder %s24, 3
    %p203 = por %p201, %p202
    %p204 = scmp.ne.s32.totalorder %s195, %s196
    %p205 = scmp.eq.s32.totalorder %s24, 0
    %p206 = por %p204, %p205
    %p207 = scmp.ne.s32.totalorder %s195, %s196
    %p208 = scmp.eq.s32.totalorder %s25, 3
    %p209 = por %p207, %p208
    %p211 = scmp.ne.s32.totalorder %s196, %s210
    %p212 = scmp.eq.s32.totalorder %s25, 0
    %p213 = por %p211, %p212
    %s215 = sadd.s32 %s214, 1
    %p218 = scmp.eq.s32.totalorder %s19, 3
    %p219 = scmp.ne.s32.totalorder %s214, %s216
    %p220 = scmp.eq.s32.totalorder %s19, 0
    %p221 = por %p219, %p220
    %p222 = scmp.ne.s32.totalorder %s214, %s216
    %p223 = scmp.eq.s32.totalorder %s24, 3
    %p224 = por %p222, %p223
    %p225 = scmp.ne.s32.totalorder %s216, %s217
    %p226 = scmp.eq.s32.totalorder %s24, 0
    %p227 = por %p225, %p226
    %p228 = scmp.ne.s32.totalorder %s216, %s217
    %p229 = scmp.eq.s32.totalorder %s25, 3
    %p230 = por %p228, %p229
    %p232 = scmp.ne.s32.totalorder %s217, %s231
    %p233 = scmp.eq.s32.totalorder %s25, 0
    %p234 = por %p232, %p233
    %s236 = sadd.s32 %s235, 1
    %p239 = scmp.eq.s32.totalorder %s19, 3
    %p240 = scmp.ne.s32.totalorder %s235, %s237
    %p241 = scmp.eq.s32.totalorder %s19, 0
    %p242 = por %p240, %p241
    %p243 = scmp.ne.s32.totalorder %s235, %s237
    %p244 = scmp.eq.s32.totalorder %s24, 3
    %p245 = por %p243, %p244
    %p246 = scmp.ne.s32.totalorder %s237, %s238
    %p247 = scmp.eq.s32.totalorder %s24, 0
    %p248 = por %p246, %p247
    %p249 = scmp.ne.s32.totalorder %s237, %s238
    %p250 = scmp.eq.s32.totalorder %s25, 3
    %p251 = por %p249, %p250
    %p253 = scmp.ne.s32.totalorder %s238, %s252
    %p254 = scmp.eq.s32.totalorder %s25, 0
    %p255 = por %p253, %p254
    %s257 = sadd.s32 %s256, 1
    %p260 = scmp.eq.s32.totalorder %s19, 3
    %p261 = scmp.ne.s32.totalorder %s256, %s258
    %p262 = scmp.eq.s32.totalorder %s19, 0
    %p263 = por %p261, %p262
    %p264 = scmp.ne.s32.totalorder %s256, %s258
    %p265 = scmp.eq.s32.totalorder %s24, 3
    %p266 = por %p264, %p265
    %p267 = scmp.ne.s32.totalorder %s258, %s259
    %p268 = scmp.eq.s32.totalorder %s24, 0
    %p269 = por %p267, %p268
    %p270 = scmp.ne.s32.totalorder %s258, %s259
    %p271 = scmp.eq.s32.totalorder %s25, 3
    %p272 = por %p270, %p271
    %p274 = scmp.ne.s32.totalorder %s259, %s273
    %p275 = scmp.eq.s32.totalorder %s25, 0
    %p276 = por %p274, %p275
    %s278 = sadd.s32 %s277, 1
    %p281 = scmp.eq.s32.totalorder %s19, 3
    %p282 = scmp.ne.s32.totalorder %s277, %s279
    %p283 = scmp.eq.s32.totalorder %s19, 0
    %p284 = por %p282, %p283
    %p285 = scmp.ne.s32.totalorder %s277, %s279
    %p286 = scmp.eq.s32.totalorder %s24, 3
    %p287 = por %p285, %p286
    %p288 = scmp.ne.s32.totalorder %s279, %s280
    %p289 = scmp.eq.s32.totalorder %s24, 0
    %p290 = por %p288, %p289
    %p291 = scmp.ne.s32.totalorder %s279, %s280
    %p292 = scmp.eq.s32.totalorder %s25, 3
    %p293 = por %p291, %p292
    %p295 = scmp.ne.s32.totalorder %s280, %s294
    %p296 = scmp.eq.s32.totalorder %s25, 0
    %p297 = por %p295, %p296
    %s299 = sadd.s32 %s298, 1
    %p302 = scmp.eq.s32.totalorder %s19, 3
    %p303 = scmp.ne.s32.totalorder %s298, %s300
    %p304 = scmp.eq.s32.totalorder %s19, 0
    %p305 = por %p303, %p304
    %p306 = scmp.ne.s32.totalorder %s298, %s300
    %p307 = scmp.eq.s32.totalorder %s24, 3
    %p308 = por %p306, %p307
    %p309 = scmp.ne.s32.totalorder %s300, %s301
    %p310 = scmp.eq.s32.totalorder %s24, 0
    %p311 = por %p309, %p310
    %p312 = scmp.ne.s32.totalorder %s300, %s301
    %p313 = scmp.eq.s32.totalorder %s25, 3
    %p314 = por %p312, %p313
    %p316 = scmp.ne.s32.totalorder %s301, %s315
    %p317 = scmp.eq.s32.totalorder %s25, 0
    %p318 = por %p316, %p317
    %s319 = ssub.s32 %s26, %s38
    %s320 = ssub.s32 %s27, %s34
    %s321 = sor.u32 %s319, %s320
    %p322 = scmp.eq.s32.totalorder %s321, 0
    %s324 = sadd.s32 %s323, 1
    %s325 = scalar_select %p322, %s323, %s324
    %p328 = pneg %p322
    %p329 = scmp.eq.s32.totalorder %s19, 3
    %p330 = por %p328, %p329
    %p331 = scmp.ne.s32.totalorder %s323, %s326
    %p332 = scmp.eq.s32.totalorder %s19, 0
    %p333 = por %p331, %p332
    %p334 = scmp.ne.s32.totalorder %s323, %s326
    %p335 = scmp.eq.s32.totalorder %s24, 3
    %p336 = por %p334, %p335
    %p337 = scmp.ne.s32.totalorder %s326, %s327
    %p338 = scmp.eq.s32.totalorder %s24, 0
    %p339 = por %p337, %p338
    %p340 = scmp.ne.s32.totalorder %s326, %s327
    %p341 = scmp.eq.s32.totalorder %s25, 3
    %p342 = por %p340, %p341
    %p344 = scmp.ne.s32.totalorder %s327, %s343
    %p345 = scmp.eq.s32.totalorder %s25, 0
    %p346 = por %p344, %p345
    %p347 = scmp.le.s32.totalorder 1, %s19
    %p348 = scmp.lt.s32.totalorder %s19, 5
    %p349 = pnand %p347, %p348
    %p350 = pneg %p349
    // Predicated region
    $region9: #{tpu_custom_call.1} parent=5 // pred_check
      _
    $region10: #{tpu_custom_call.1} parent=5 // pred_check_branch
      %352 = sbr.rel (%p349) target = $region12
    $region11: #{tpu_custom_call.1} parent=5 // pred_region
      %s353 = ssub.s32 %s19, 1
      // Predicated region
      $region13: #{tpu_custom_call.1} parent=11 // pred_check
        %p354 = pneg %p80
      $region14: #{tpu_custom_call.1} parent=11 // pred_check_branch
        %356 = sbr.rel (%p354) target = $region16
      $region15: #{tpu_custom_call.1} parent=11 // pred_region
        _
      $region16: #{tpu_custom_call.1} parent=11 // pred_fallthru
        _
      // Predicated region
      $region17: #{tpu_custom_call.1} parent=11 // pred_check
        %p357 = pneg %p101
      $region18: #{tpu_custom_call.1} parent=11 // pred_check_branch
        %359 = sbr.rel (%p357) target = $region20
      $region19: #{tpu_custom_call.1} parent=11 // pred_region
        _
      $region20: #{tpu_custom_call.1} parent=11 // pred_fallthru
        _
      // Predicated region
      $region21: #{tpu_custom_call.1} parent=11 // pred_check
        %p360 = pneg %p122
      $region22: #{tpu_custom_call.1} parent=11 // pred_check_branch
        %362 = sbr.rel (%p360) target = $region24
      $region23: #{tpu_custom_call.1} parent=11 // pred_region
        _
      $region24: #{tpu_custom_call.1} parent=11 // pred_fallthru
        _
      // Predicated region
      $region25: #{tpu_custom_call.1} parent=11 // pred_check
        %p363 = pneg %p143
      $region26: #{tpu_custom_call.1} parent=11 // pred_check_branch
        %365 = sbr.rel (%p363) target = $region28
      $region27: #{tpu_custom_call.1} parent=11 // pred_region
        _
      $region28: #{tpu_custom_call.1} parent=11 // pred_fallthru
        _
      // Predicated region
      $region29: #{tpu_custom_call.1} parent=11 // pred_check
        %p366 = pneg %p164
      $region30: #{tpu_custom_call.1} parent=11 // pred_check_branch
        %368 = sbr.rel (%p366) target = $region32
      $region31: #{tpu_custom_call.1} parent=11 // pred_region
        _
      $region32: #{tpu_custom_call.1} parent=11 // pred_fallthru
        _
      // Predicated region
      $region33: #{tpu_custom_call.1} parent=11 // pred_check
        %p369 = pneg %p185
      $region34: #{tpu_custom_call.1} parent=11 // pred_check_branch
        %371 = sbr.rel (%p369) target = $region36
      $region35: #{tpu_custom_call.1} parent=11 // pred_region
        _
      $region36: #{tpu_custom_call.1} parent=11 // pred_fallthru
        _
      // Predicated region
      $region37: #{tpu_custom_call.1} parent=11 // pred_check
        %p372 = pneg %p206
      $region38: #{tpu_custom_call.1} parent=11 // pred_check_branch
        %374 = sbr.rel (%p372) target = $region40
      $region39: #{tpu_custom_call.1} parent=11 // pred_region
        _
      $region40: #{tpu_custom_call.1} parent=11 // pred_fallthru
        _
      // Predicated region
      $region41: #{tpu_custom_call.1} parent=11 // pred_check
        %p375 = pneg %p227
      $region42: #{tpu_custom_call.1} parent=11 // pred_check_branch
        %377 = sbr.rel (%p375) target = $region44
      $region43: #{tpu_custom_call.1} parent=11 // pred_region
        _
      $region44: #{tpu_custom_call.1} parent=11 // pred_fallthru
        _
      // Predicated region
      $region45: #{tpu_custom_call.1} parent=11 // pred_check
        %p378 = pneg %p248
      $region46: #{tpu_custom_call.1} parent=11 // pred_check_branch
        %380 = sbr.rel (%p378) target = $region48
      $region47: #{tpu_custom_call.1} parent=11 // pred_region
        _
      $region48: #{tpu_custom_call.1} parent=11 // pred_fallthru
        _
      // Predicated region
      $region49: #{tpu_custom_call.1} parent=11 // pred_check
        %p381 = pneg %p269
      $region50: #{tpu_custom_call.1} parent=11 // pred_check_branch
        %383 = sbr.rel (%p381) target = $region52
      $region51: #{tpu_custom_call.1} parent=11 // pred_region
        _
      $region52: #{tpu_custom_call.1} parent=11 // pred_fallthru
        _
      // Predicated region
      $region53: #{tpu_custom_call.1} parent=11 // pred_check
        %p384 = pneg %p290
      $region54: #{tpu_custom_call.1} parent=11 // pred_check_branch
        %386 = sbr.rel (%p384) target = $region56
      $region55: #{tpu_custom_call.1} parent=11 // pred_region
        _
      $region56: #{tpu_custom_call.1} parent=11 // pred_fallthru
        _
      // Predicated region
      $region57: #{tpu_custom_call.1} parent=11 // pred_check
        %p387 = pneg %p311
      $region58: #{tpu_custom_call.1} parent=11 // pred_check_branch
        %389 = sbr.rel (%p387) target = $region60
      $region59: #{tpu_custom_call.1} parent=11 // pred_region
        _
      $region60: #{tpu_custom_call.1} parent=11 // pred_fallthru
        _
    $region12: #{tpu_custom_call.1} parent=5 // pred_fallthru
      _
    %p390 = scmp.lt.s32.totalorder %s19, 4
    // Predicated region
    $region61: #{tpu_custom_call.1} parent=5 // pred_check
      %p391 = pneg %p390
    $region62: #{tpu_custom_call.1} parent=5 // pred_check_branch
      %393 = sbr.rel (%p391) target = $region64
    $region63: #{tpu_custom_call.1} parent=5 // pred_region
      // Predicated region
      $region65: #{tpu_custom_call.1} parent=63 // pred_check
        %p394 = pneg %p53
      $region66: #{tpu_custom_call.1} parent=63 // pred_check_branch
        %396 = sbr.rel (%p394) target = $region68
      $region67: #{tpu_custom_call.1} parent=63 // pred_region
        %s397 = smul.u32 2, %s27
        %p398 = scmp.lt.s32.totalorder %s26, 1
        %s399 = scalar_select %p398, %s26, 1
        %p400 = scmp.lt.s32.totalorder %s397, 3
        %s401 = scalar_select %p400, %s397, 3
        %s402 = smul.addr %s399, 4
        %s403 = sadd.s32 %s401, %s402
        %s404 = smul.addr %s403, 8
        %s405 = scalar_lea.vmem %s0, %s404
        %s406 = smul.u32 2, %s27
      $region68: #{tpu_custom_call.1} parent=63 // pred_fallthru
        _
    $region64: #{tpu_custom_call.1} parent=5 // pred_fallthru
      _
    %p407 = scmp.le.s32.totalorder 1, %s19
    %p408 = scmp.lt.s32.totalorder %s19, 5
    %p409 = pnand %p407, %p408
    %p410 = pneg %p409
    // Predicated region
    $region69: #{tpu_custom_call.1} parent=5 // pred_check
      _
    $region70: #{tpu_custom_call.1} parent=5 // pred_check_branch
      %412 = sbr.rel (%p409) target = $region72
    $region71: #{tpu_custom_call.1} parent=5 // pred_region
      %s413 = ssub.s32 %s19, 1
      %s414 = smul.u32 2, %s29
      %p415 = scmp.lt.s32.totalorder %s28, 1
      %s416 = scalar_select %p415, %s28, 1
      %p417 = scmp.lt.s32.totalorder %s414, 3
      %s418 = scalar_select %p417, %s414, 3
      %s419 = smul.addr %s416, 4
      %s420 = sadd.s32 %s418, %s419
      %s421 = smul.addr %s420, 8
      %s422 = scalar_lea.vmem %s0, %s421
      %p423 = pneg %p59
      %p424 = pneg %p56
      %p425 = pneg %p80
      %p426 = pneg %p77
      %p427 = pneg %p101
      %p428 = pneg %p98
      %p429 = pneg %p122
      %p430 = pneg %p119
      %p431 = pneg %p143
      %p432 = pneg %p140
      %p433 = pneg %p164
      %p434 = pneg %p161
      %p435 = pneg %p185
      %p436 = pneg %p182
      %p437 = pneg %p206
      %p438 = pneg %p203
      %p439 = pneg %p227
      %p440 = pneg %p224
      %p441 = pneg %p248
      %p442 = pneg %p245
      %p443 = pneg %p269
      %p444 = pneg %p266
      %p445 = pneg %p290
      %p446 = pneg %p287
      %p447 = pneg %p311
      %p448 = pneg %p308
      %p449 = pneg %p339
      %p450 = pneg %p336
      %s451 = smul.u32 2, %s29
      %p452 = scmp.lt.s32.totalorder %s28, 1
      %s453 = scalar_select %p452, %s28, 1
      %p454 = scmp.lt.s32.totalorder %s451, 3
      %s455 = scalar_select %p454, %s451, 3
      %s456 = smul.addr %s453, 4
      %s457 = sadd.s32 %s455, %s456
      %s458 = smul.addr %s457, 8
      %s459 = scalar_lea.vmem %s13, %s458
      %s460 = smul.u32 2, %s29
      %p461 = scmp.lt.s32.totalorder %s28, 1
      %s462 = scalar_select %p461, %s28, 1
      %p463 = scmp.lt.s32.totalorder %s460, 3
      %s464 = scalar_select %p463, %s460, 3
      %s465 = smul.addr %s462, 4
      %s466 = sadd.s32 %s464, %s465
      %s467 = smul.addr %s466, 8
      %s468 = scalar_lea.vmem %s0, %s467
      %s469 = smul.u32 2, %s29
      %s470 = smul.u32 2, %s29
      %p471 = scmp.lt.s32.totalorder %s28, 1
      %s472 = scalar_select %p471, %s28, 1
      %p473 = scmp.lt.s32.totalorder %s470, 3
      %s474 = scalar_select %p473, %s470, 3
      %s475 = smul.addr %s472, 4
      %s476 = sadd.s32 %s474, %s475
      %s477 = smul.addr %s476, 8
      %s478 = scalar_lea.vmem %s13, %s477
      %s479 = smul.u32 2, %s29
      %p481 = scmp.eq.s32.totalorder %s29, 0
      // Predicated region
      $region73: #{tpu_custom_call.1} parent=71 // pred_check
        %p482 = pneg %p481
      $region74: #{tpu_custom_call.1} parent=71 // pred_check_branch
        %484 = sbr.rel (%p482) target = $region76
      $region75: #{tpu_custom_call.1} parent=71 // pred_region
        %vm485 = vcmask 261120
        %486 = vst.msk [vmem:[#allocation7] sm:$0xff] %vm485, 0.0
        %487 = vst.msk [vmem:[#allocation7 + $0x8] sm:$0xff] %vm485, 0.0
        %488 = vst.msk [vmem:[#allocation2] sm:$0xff] %vm485, 0.0
      $region76: #{tpu_custom_call.1} parent=71 // pred_fallthru
        _
      %p489 = scmp.gt.s32.totalorder %s29, 0
      // Predicated region
      $region77: #{tpu_custom_call.1} parent=71 // pred_check
        %p490 = pneg %p489
      $region78: #{tpu_custom_call.1} parent=71 // pred_check_branch
        %492 = sbr.rel (%p490) target = $region80
      $region79: #{tpu_custom_call.1} parent=71 // pred_region
        %v493 = vld [vmem:[#allocation2 + $0x10] sm:$0xff]
        %vm494 = vcmask 261120
        %495 = vst.msk [vmem:[#allocation2] sm:$0xff] %vm494, %v493
      $region80: #{tpu_custom_call.1} parent=71 // pred_fallthru
        _
      %v496 = vld [vmem:[%s468] sm:$0xff]
      %v497 = vld [vmem:[%s468 + $0x8] sm:$0xff]
      %v498 = vpack.c.bf16 %v497, %v496
      %v499 = vld [vmem:[%s1] sm:$0xf]
      %v500 = vld [vmem:[%s1 + $0x4] sm:$0xf]
      %v501 = vld [vmem:[%s2] sm:$0x1]
      %v503 = vlaneseq
      %v504 = vshrl.u32 %v503, 7
      %v505 = vsub.s32 0, %v504
      %v506 = vrot.slane %v501, %v505
      %v510 = vunpack.c.l.b16 %v499
      %v511 = vunpack.c.l.b16 %v500
      %v512 = vpack.c.b16 %v511, %v510
      %vm514 = vcmask 130048
      %v516 = vsel %vm514, %v498, 0
      %518 = vmatprep.subr.bf16.mxu0 0
      %519 = vmatpush1.bf16.msra.mxu0 0
      %520 = vmatprep.subr.bf16.mxu0 0
      %521 = vmatpush1.bf16.msra.mxu0 0
      %522 = vmatprep.subr.bf16.mxu0 0
      %523 = vmatpush1.bf16.msra.mxu0 0
      %524 = vmatprep.subr.bf16.mxu0 0
      %525 = vmatpush1.bf16.msra.mxu0 0
      %526 = vmatprep.subr.bf16.mxu0 0
      %527 = vmatpush1.bf16.msra.mxu0 0
      %528 = vmatprep.subr.bf16.mxu0 0
      %529 = vmatpush1.bf16.msra.mxu0 0
      %530 = vmatprep.subr.bf16.mxu0 0
      %531 = vmatpush1.bf16.msra.mxu0 0
      %532 = vmatprep.subr.bf16.mxu0 0
      %533 = vmatpush1.bf16.msra.mxu0 %v512
      %534 = vmatprep.subr.bf16.mxu0 0
      %535 = vmatpush2.bf16.msra.mxu0 0
      %536 = vmatprep.subr.bf16.mxu0 0
      %537 = vmatpush2.bf16.msra.mxu0 0
      %538 = vmatprep.subr.bf16.mxu0 0
      %539 = vmatpush2.bf16.msra.mxu0 0
      %540 = vmatprep.subr.bf16.mxu0 0
      %541 = vmatpush2.bf16.msra.mxu0 0
      %542 = vmatprep.subr.bf16.mxu0 0
      %543 = vmatpush2.bf16.msra.mxu0 0
      %544 = vmatprep.subr.bf16.mxu0 0
      %545 = vmatpush2.bf16.msra.mxu0 0
      %546 = vmatprep.subr.bf16.mxu0 0
      %547 = vmatpush2.bf16.msra.mxu0 0
      %548 = vmatprep.subr.bf16.mxu0 0
      %549 = vmatpush2.bf16.msra.mxu0 0
      %550 = vmatprep.mubr.bf16.mxu0 0
      %551 = vmatmul.mubr.bf16.gmra.mxu0 %v516
      %v552 = vpop.f32.mrf.mxu0
      %v553 = vadd.f32 %v506, %v552
      %v554 = vpop.f32.mrf.mxu0
      %v555 = vpop.f32.mrf.mxu0
      %v556 = vadd.f32 %v506, %v555
      %v557 = vpop.f32.mrf.mxu0
      %558 = vdwg.mxu0
      %vm559 = vcmask 261120
      %560 = vst.msk [vmem:[#allocation2 + $0x8] sm:$0xff] %vm559, %v553
      %561 = vst.msk [vmem:[#allocation2 + $0x10] sm:$0xff] %vm559, %v556
      %v562 = vld [vmem:[%s4] sm:$0x1]
      %v564 = vlaneseq
      %v565 = vshrl.u32 %v564, 7
      %v566 = vsub.s32 0, %v565
      %v567 = vrot.slane %v562, %v566
      %v569 = vadd.f32 %v567, 0.0
      %v570 = vld [vmem:[#allocation2 + $0x5] sm:$0xff]
      %v571 = vld [vmem:[#allocation2 + $0xd] sm:$0xff]
      %v572 = vld [vmem:[%s3] sm:$0x1]
      %v573 = vlaneseq
      %v574 = vshrl.u32 %v573, 7
      %v575 = vsub.s32 0, %v574
      %v576 = vrot.slane %v572, %v575
      %v577 = vmul.f32 %v570, %v576
      %v578 = vmul.f32 %v571, %v576
      %v579 = vadd.f32 %v569, %v577
      %v580 = vadd.f32 %v569, %v578
      %v581 = vld [vmem:[#allocation2 + $0x6] sm:$0xff]
      %v582 = vld [vmem:[#allocation2 + $0xe] sm:$0xff]
      %v583 = vld [vmem:[%s3 + $0x1] sm:$0x1]
      %v584 = vlaneseq
      %v585 = vshrl.u32 %v584, 7
      %v586 = vsub.s32 0, %v585
      %v587 = vrot.slane %v583, %v586
      %v588 = vmul.f32 %v581, %v587
      %v589 = vmul.f32 %v582, %v587
      %v590 = vadd.f32 %v579, %v588
      %v591 = vadd.f32 %v580, %v589
      %v592 = vld [vmem:[#allocation2 + $0x7] sm:$0xff]
      %v593 = vld [vmem:[#allocation2 + $0xf] sm:$0xff]
      %v594 = vld [vmem:[%s3 + $0x2] sm:$0x1]
      %v595 = vlaneseq
      %v596 = vshrl.u32 %v595, 7
      %v597 = vsub.s32 0, %v596
      %v598 = vrot.slane %v594, %v597
      %v599 = vmul.f32 %v592, %v598
      %v600 = vmul.f32 %v593, %v598
      %v601 = vadd.f32 %v590, %v599
      %v602 = vadd.f32 %v591, %v600
      %v603 = vld [vmem:[#allocation2 + $0x8] sm:$0xff]
      %v604 = vld [vmem:[#allocation2 + $0x10] sm:$0xff]
      %v605 = vld [vmem:[%s3 + $0x3] sm:$0x1]
      %v606 = vlaneseq
      %v607 = vshrl.u32 %v606, 7
      %v608 = vsub.s32 0, %v607
      %v609 = vrot.slane %v605, %v608
      %v610 = vmul.f32 %v603, %v609
      %v611 = vmul.f32 %v604, %v609
      %v612 = vadd.f32 %v601, %v610
      %v613 = vadd.f32 %v602, %v611
      %v614 = vsub.f32 0.0, %v612
      %v615 = vsub.f32 0.0, %v613
      %v616 = vmul.f32 %v614, 1.442695
      %v617 = vpow.pop %v616
      %v618 = vmul.f32 %v615, 1.442695
      %v619 = vpow.pop %v618
      %v620 = vadd.f32 %v617, 1.0
      %v621 = vadd.f32 %v619, 1.0
      %v622 = vrcp.pop %v620
      %v623 = vrcp.pop %v621
      %v624 = vmul.f32 %v612, %v622
      %v625 = vmul.f32 %v613, %v623
      %626 = vst.msk [vmem:[#allocation3] sm:$0xff] %vm559, %v624
      %627 = vst.msk [vmem:[#allocation3 + $0x8] sm:$0xff] %vm559, %v625
      %v628 = vpack.c.bf16 %v625, %v624
      %v629 = vld [vmem:[%s5] sm:$0xf]
      %v630 = vld [vmem:[%s5 + $0x4] sm:$0xf]
      %v631 = vld [vmem:[%s5 + $0x8] sm:$0xf]
      %v632 = vld [vmem:[%s5 + $0xc] sm:$0xf]
      %v633 = vld [vmem:[%s6] sm:$0x1]
      %v635 = vlaneseq
      %v636 = vshrl.u32 %v635, 7
      %v637 = vsub.s32 0, %v636
      %v638 = vrot.slane %v633, %v637
      %v644 = vunpack.c.l.b16 %v629
      %v645 = vunpack.c.l.b16 %v630
      %v646 = vunpack.c.l.b16 %v631
      %v647 = vunpack.c.l.b16 %v632
      %v648 = vpack.c.b16 %v645, %v644
      %v649 = vpack.c.b16 %v647, %v646
      %v653 = vsel %vm559, %v628, 0
      %655 = vmatprep.subr.bf16.mxu0 0
      %656 = vmatpush1.bf16.msra.mxu0 0
      %657 = vmatprep.subr.bf16.mxu0 0
      %658 = vmatpush1.bf16.msra.mxu0 0
      %659 = vmatprep.subr.bf16.mxu0 0
      %660 = vmatpush1.bf16.msra.mxu0 0
      %661 = vmatprep.subr.bf16.mxu0 0
      %662 = vmatpush1.bf16.msra.mxu0 0
      %663 = vmatprep.subr.bf16.mxu0 0
      %664 = vmatpush1.bf16.msra.mxu0 0
      %665 = vmatprep.subr.bf16.mxu0 0
      %666 = vmatpush1.bf16.msra.mxu0 0
      %667 = vmatprep.subr.bf16.mxu0 0
      %668 = vmatpush1.bf16.msra.mxu0 %v649
      %669 = vmatprep.subr.bf16.mxu0 0
      %670 = vmatpush1.bf16.msra.mxu0 %v648
      %671 = vmatprep.subr.bf16.mxu0 0
      %672 = vmatpush2.bf16.msra.mxu0 0
      %673 = vmatprep.subr.bf16.mxu0 0
      %674 = vmatpush2.bf16.msra.mxu0 0
      %675 = vmatprep.subr.bf16.mxu0 0
      %676 = vmatpush2.bf16.msra.mxu0 0
      %677 = vmatprep.subr.bf16.mxu0 0
      %678 = vmatpush2.bf16.msra.mxu0 0
      %679 = vmatprep.subr.bf16.mxu0 0
      %680 = vmatpush2.bf16.msra.mxu0 0
      %681 = vmatprep.subr.bf16.mxu0 0
      %682 = vmatpush2.bf16.msra.mxu0 0
      %683 = vmatprep.subr.bf16.mxu0 0
      %684 = vmatpush2.bf16.msra.mxu0 0
      %685 = vmatprep.subr.bf16.mxu0 0
      %686 = vmatpush2.bf16.msra.mxu0 0
      %687 = vmatprep.mubr.bf16.mxu0 0
      %688 = vmatmul.mubr.bf16.gmra.mxu0 %v653
      %v689 = vpop.f32.mrf.mxu0
      %v690 = vadd.f32 %v638, %v689
      %v691 = vpop.f32.mrf.mxu0
      %v692 = vpop.f32.mrf.mxu0
      %v693 = vadd.f32 %v638, %v692
      %v694 = vpop.f32.mrf.mxu0
      %695 = vdwg.mxu0
      %697 = vrot.lane.b32.xlu0 %v690, 112
      %v698 = vpop.permute.xlu0 %697
      %700 = vxpose.xlu0.b32.start [1/16] %v698, 128
      %701 = vxpose.xlu0.b32.cont [2/16] 0.0, 128
      %702 = vxpose.xlu0.b32.cont [3/16] 0.0, 128
      %703 = vxpose.xlu0.b32.cont [4/16] 0.0, 128
      %704 = vxpose.xlu0.b32.cont [5/16] 0.0, 128
      %705 = vxpose.xlu0.b32.cont [6/16] 0.0, 128
      %706 = vxpose.xlu0.b32.cont [7/16] 0.0, 128
      %707 = vxpose.xlu0.b32.cont [8/16] 0.0, 128
      %708 = vxpose.xlu0.b32.cont [9/16] 0.0, 128
      %709 = vxpose.xlu0.b32.cont [10/16] 0.0, 128
      %710 = vxpose.xlu0.b32.cont [11/16] 0.0, 128
      %711 = vxpose.xlu0.b32.cont [12/16] 0.0, 128
      %712 = vxpose.xlu0.b32.cont [13/16] 0.0, 128
      %713 = vxpose.xlu0.b32.cont [14/16] 0.0, 128
      %714 = vxpose.xlu0.b32.cont [15/16] 0.0, 128
      %715 = vxpose.xlu0.b32.end [16/16] 0.0, 128
      %v716 = vpop.trf.xlu0
      %v717 = vpop.trf.xlu0
      %v718 = vpop.trf.xlu0
      %v719 = vpop.trf.xlu0
      %v720 = vpop.trf.xlu0
      %v721 = vpop.trf.xlu0
      %v722 = vpop.trf.xlu0
      %v723 = vpop.trf.xlu0
      %v724 = vpop.trf.xlu0
      %v725 = vpop.trf.xlu0
      %v726 = vpop.trf.xlu0
      %v727 = vpop.trf.xlu0
      %v728 = vpop.trf.xlu0
      %v729 = vpop.trf.xlu0
      %v730 = vpop.trf.xlu0
      %v731 = vpop.trf.xlu0
      %vm732 = vcmask 64512
      %733 = vst.msk [vmem:[#allocation5] sm:$0xff] %vm732, %v716
      %734 = vst.msk [vmem:[#allocation5 + $0x8] sm:$0xff] %vm732, %v717
      %735 = vst.msk [vmem:[#allocation5 + $0x10] sm:$0xff] %vm732, %v718
      %736 = vst.msk [vmem:[#allocation5 + $0x18] sm:$0xff] %vm732, %v719
      %738 = vrot.lane.b32.xlu0 %v693, 112
      %v739 = vpop.permute.xlu0 %738
      %741 = vxpose.xlu0.b32.start [1/16] %v739, 128
      %742 = vxpose.xlu0.b32.cont [2/16] 0.0, 128
      %743 = vxpose.xlu0.b32.cont [3/16] 0.0, 128
      %744 = vxpose.xlu0.b32.cont [4/16] 0.0, 128
      %745 = vxpose.xlu0.b32.cont [5/16] 0.0, 128
      %746 = vxpose.xlu0.b32.cont [6/16] 0.0, 128
      %747 = vxpose.xlu0.b32.cont [7/16] 0.0, 128
      %748 = vxpose.xlu0.b32.cont [8/16] 0.0, 128
      %749 = vxpose.xlu0.b32.cont [9/16] 0.0, 128
      %750 = vxpose.xlu0.b32.cont [10/16] 0.0, 128
      %751 = vxpose.xlu0.b32.cont [11/16] 0.0, 128
      %752 = vxpose.xlu0.b32.cont [12/16] 0.0, 128
      %753 = vxpose.xlu0.b32.cont [13/16] 0.0, 128
      %754 = vxpose.xlu0.b32.cont [14/16] 0.0, 128
      %755 = vxpose.xlu0.b32.cont [15/16] 0.0, 128
      %756 = vxpose.xlu0.b32.end [16/16] 0.0, 128
      %v757 = vpop.trf.xlu0
      %v758 = vpop.trf.xlu0
      %v759 = vpop.trf.xlu0
      %v760 = vpop.trf.xlu0
      %v761 = vpop.trf.xlu0
      %v762 = vpop.trf.xlu0
      %v763 = vpop.trf.xlu0
      %v764 = vpop.trf.xlu0
      %v765 = vpop.trf.xlu0
      %v766 = vpop.trf.xlu0
      %v767 = vpop.trf.xlu0
      %v768 = vpop.trf.xlu0
      %v769 = vpop.trf.xlu0
      %v770 = vpop.trf.xlu0
      %v771 = vpop.trf.xlu0
      %v772 = vpop.trf.xlu0
      %773 = vst.msk [vmem:[#allocation5 + $0x20] sm:$0xff] %vm732, %v757
      %774 = vst.msk [vmem:[#allocation5 + $0x28] sm:$0xff] %vm732, %v758
      %775 = vst.msk [vmem:[#allocation5 + $0x30] sm:$0xff] %vm732, %v759
      %776 = vst.msk [vmem:[#allocation5 + $0x38] sm:$0xff] %vm732, %v760
      %v777 = vld [vmem:[%s7] sm:$0xff]
      %v778 = vld [vmem:[%s7 + $0x8] sm:$0xff]
      %v779 = vld [vmem:[%s8] sm:$0x1]
      %v781 = vlaneseq
      %v782 = vshrl.u32 %v781, 7
      %v783 = vsub.s32 0, %v782
      %v784 = vrot.slane %v779, %v783
      %v786 = vsel %vm514, %v690, 0
      %v788 = vsel %vm514, %v693, 0
      %790 = vmatprep.subr.mxu0 0.0
      %791 = vmatpush1.msra.mxu0 0.0
      %792 = vmatprep.subr.mxu0 0.0
      %793 = vmatpush1.msra.mxu0 0.0
      %794 = vmatprep.subr.mxu0 0.0
      %795 = vmatpush1.msra.mxu0 0.0
      %796 = vmatprep.subr.mxu0 0.0
      %797 = vmatpush1.msra.mxu0 0.0
      %798 = vmatprep.subr.mxu0 0.0
      %799 = vmatpush1.msra.mxu0 0.0
      %800 = vmatprep.subr.mxu0 0.0
      %801 = vmatpush1.msra.mxu0 0.0
      %802 = vmatprep.subr.mxu0 0.0
      %803 = vmatpush1.msra.mxu0 0.0
      %804 = vmatprep.subr.mxu0 0.0
      %805 = vmatpush1.msra.mxu0 0.0
      %806 = vmatprep.subr.mxu0 0.0
      %807 = vmatpush1.msra.mxu0 0.0
      %808 = vmatprep.subr.mxu0 0.0
      %809 = vmatpush1.msra.mxu0 0.0
      %810 = vmatprep.subr.mxu0 0.0
      %811 = vmatpush1.msra.mxu0 0.0
      %812 = vmatprep.subr.mxu0 0.0
      %813 = vmatpush1.msra.mxu0 0.0
      %814 = vmatprep.subr.mxu0 0.0
      %815 = vmatpush1.msra.mxu0 0.0
      %816 = vmatprep.subr.mxu0 0.0
      %817 = vmatpush1.msra.mxu0 0.0
      %818 = vmatprep.subr.mxu0 0.0
      %819 = vmatpush1.msra.mxu0 %v778
      %820 = vmatprep.subr.mxu0 0.0
      %821 = vmatpush1.msra.mxu0 %v777
      %822 = vmatprep.subr.mxu0 0.0
      %823 = vmatpush2.msra.mxu0 0.0
      %824 = vmatprep.subr.mxu0 0.0
      %825 = vmatpush2.msra.mxu0 0.0
      %826 = vmatprep.subr.mxu0 0.0
      %827 = vmatpush2.msra.mxu0 0.0
      %828 = vmatprep.subr.mxu0 0.0
      %829 = vmatpush2.msra.mxu0 0.0
      %830 = vmatprep.subr.mxu0 0.0
      %831 = vmatpush2.msra.mxu0 0.0
      %832 = vmatprep.subr.mxu0 0.0
      %833 = vmatpush2.msra.mxu0 0.0
      %834 = vmatprep.subr.mxu0 0.0
      %835 = vmatpush2.msra.mxu0 0.0
      %836 = vmatprep.subr.mxu0 0.0
      %837 = vmatpush2.msra.mxu0 0.0
      %838 = vmatprep.subr.mxu0 0.0
      %839 = vmatpush2.msra.mxu0 0.0
      %840 = vmatprep.subr.mxu0 0.0
      %841 = vmatpush2.msra.mxu0 0.0
      %842 = vmatprep.subr.mxu0 0.0
      %843 = vmatpush2.msra.mxu0 0.0
      %844 = vmatprep.subr.mxu0 0.0
      %845 = vmatpush2.msra.mxu0 0.0
      %846 = vmatprep.subr.mxu0 0.0
      %847 = vmatpush2.msra.mxu0 0.0
      %848 = vmatprep.subr.mxu0 0.0
      %849 = vmatpush2.msra.mxu0 0.0
      %850 = vmatprep.subr.mxu0 0.0
      %851 = vmatpush2.msra.mxu0 0.0
      %852 = vmatprep.subr.mxu0 0.0
      %853 = vmatpush2.msra.mxu0 0.0
      %854 = vmatprep.mubr.f32.mxu0 0.0
      %855 = vmatmul.mubr.f32.gmra.mxu0 %v786
      %v856 = vpop.f32.mrf.mxu0
      %v857 = vadd.f32 %v784, %v856
      %v858 = vpop.f32.mrf.mxu0
      %859 = vmatprep.mubr.f32.mxu0 0.0
      %860 = vmatmul.mubr.f32.gmra.mxu0 %v788
      %v861 = vpop.f32.mrf.mxu0
      %v862 = vadd.f32 %v784, %v861
      %v863 = vpop.f32.mrf.mxu0
      %864 = vdwg.mxu0
      %v865 = vmax.f32 %v857, 0.0
      %v866 = vmax.f32 %v862, 0.0
      %v867 = vand.u32 2147483647, %v857
      %v868 = vand.u32 2147483647, %v862
      %v869 = vsub.f32 0.0, %v867
      %v870 = vsub.f32 0.0, %v868
      %v871 = vmul.f32 %v869, 1.442695
      %v872 = vpow.pop %v871
      %v873 = vmul.f32 %v870, 1.442695
      %v874 = vpow.pop %v873
      %v875 = vadd.f32 %v872, 1.0
      %v876 = vlog2.pop %v875
      %v877 = vmul.f32 %v876, 0.6931472
      %v878 = vmul.f32 -0.5, %v872
      %v879 = vadd.f32 %v878, 1.0
      %v880 = vmul.f32 %v879, %v872
      %v881 = vand.u32 2147483647, %v872
      %vm882 = vcmp.lt.f32.partialorder %v881, 0.0004427343
      %v883 = vsel %vm882, %v880, %v877
      %v884 = vadd.f32 %v874, 1.0
      %v885 = vlog2.pop %v884
      %v886 = vmul.f32 %v885, 0.6931472
      %v887 = vmul.f32 -0.5, %v874
      %v888 = vadd.f32 %v887, 1.0
      %v889 = vmul.f32 %v888, %v874
      %v890 = vand.u32 2147483647, %v874
      %vm891 = vcmp.lt.f32.partialorder %v890, 0.0004427343
      %v892 = vsel %vm891, %v889, %v886
      %v893 = vadd.f32 %v865, %v883
      %v894 = vadd.f32 %v866, %v892
      %895 = vst.msk [vmem:[#allocation4] sm:$0xff] %vm559, %v893
      %896 = vst.msk [vmem:[#allocation4 + $0x8] sm:$0xff] %vm559, %v894
      %v897 = vsub.f32 0.0, %v553
      %v898 = vsub.f32 0.0, %v556
      %v899 = vmul.f32 %v897, 1.442695
      %v900 = vpow.pop %v899
      %v901 = vmul.f32 %v898, 1.442695
      %v902 = vpow.pop %v901
      %v903 = vadd.f32 %v900, 1.0
      %v904 = vadd.f32 %v902, 1.0
      %v905 = vrcp.pop %v903
      %v906 = vrcp.pop %v904
      %v907 = vmul.f32 %v553, %v905
      %v908 = vmul.f32 %v556, %v906
      %911 = vrot.lane.b32.xlu0 %v907, 96
      %v912 = vpop.permute.xlu0 %911
      %913 = vrot.lane.b32.xlu0 %v908, 96
      %v914 = vpop.permute.xlu0 %913
      %917 = vst.msk [vmem:[#allocation6] sm:$0xff] %vm559, %v912
      %918 = vst.msk [vmem:[#allocation6 + $0x8] sm:$0xff] %vm559, %v914
      %v919 = vld [vmem:[%s9] sm:$0xff]
      %v920 = vld [vmem:[%s9 + $0x8] sm:$0xff]
      %v921 = vld [vmem:[%s10] sm:$0x1]
      %v922 = vld [vmem:[#allocation7] sm:$0xff]
      %v923 = vld [vmem:[#allocation7 + $0x8] sm:$0xff]
      loop: start=0, step=1, limit=2
      $region81: #{tpu_custom_call.1} parent=71 // loop_pre_header
        _
      $region82: #{tpu_custom_call.1} parent=71 // loop_header
        %s925 = sphi 0, %s929
        %p926 = scmp.ge.s32.totalorder %s925, 2
        %v930 = vphi %v922, %v1283
        %v931 = vphi %v923, %v1284
      $region83: #{tpu_custom_call.1} parent=71 // loop_header_branch
        %928 = sbr.rel (%p926) target = $region87
      $region84: #{tpu_custom_call.1} parent=71 // loop_body
        %s932 = smul.u32 %s925, 8
        %s933 = smul.u32 %s925, 32
        %s934 = scalar_lea.vmem [#allocation5], %s933
        %v935 = vld [vmem:[%s934] sm:$0xff]
        %v936 = vld [vmem:[%s934 + $0x8] sm:$0xff]
        %s937 = sadd.s32 %s933, 16
        %s938 = scalar_lea.vmem [#allocation5], %s937
        %v939 = vld [vmem:[%s938] sm:$0xff]
        %v940 = vld [vmem:[%s938 + $0x8] sm:$0xff]
        %s941 = scalar_lea.vmem [#allocation4], %s932
        %v942 = vld [vmem:[%s941] ss:$0 sm:$0xff]
        %s943 = scalar_lea.vmem [#allocation3], %s932
        %v944 = vld [vmem:[%s943] ss:$0 sm:$0xff]
        %v945 = vmul.f32 %v942, %v919
        %v946 = vmul.f32 %v942, %v920
        %v947 = vmul.f32 %v945, 1.442695
        %v948 = vpow.pop %v947
        %v949 = vmul.f32 %v946, 1.442695
        %v950 = vpow.pop %v949
        %v951 = vmul.f32 %v948, %v930
        %v952 = vmul.f32 %v950, %v931
        %v953 = vmul.f32 %v942, %v944
        %955 = vset.pattern.permute.xlu0 0
        %956 = vperm.xlu0 %955, %v935
        %v957 = vpop.permute.xlu0 %956
        %960 = vset.pattern.permute.xlu0 0
        %961 = vperm.xlu0 %960, %v936
        %v962 = vpop.permute.xlu0 %961
        %v964 = vmul.f32 %v953, %v957
        %v965 = vmul.f32 %v953, %v962
        %v966 = vadd.f32 %v951, %v964
        %v967 = vadd.f32 %v952, %v965
        %969 = vset.pattern.permute.xlu0 0
        %970 = vperm.xlu0 %969, %v939
        %v971 = vpop.permute.xlu0 %970
        %974 = vset.pattern.permute.xlu0 0
        %975 = vperm.xlu0 %974, %v940
        %v976 = vpop.permute.xlu0 %975
        %v978 = vmul.f32 %v966, %v971
        %v979 = vmul.f32 %v967, %v976
        %v980 = vsel %vm559, %v978, 0.0
        %v981 = vsel %vm559, %v979, 0.0
        %v982 = vadd.f32 %v980, %v981
        %v983 = vrot.slane %v982, 4
        %v984 = vadd.f32 %v982, %v983
        %v985 = vrot.slane %v984, 2
        %v986 = vadd.f32 %v984, %v985
        %v987 = vrot.slane %v986, 1
        %v988 = vadd.f32 %v986, %v987
        %s989 = sadd.s32 %s932, 1
        %s990 = scalar_lea.vmem [#allocation4], %s989
        %v991 = vld [vmem:[%s990] ss:$0 sm:$0xff]
        %s992 = scalar_lea.vmem [#allocation3], %s989
        %v993 = vld [vmem:[%s992] ss:$0 sm:$0xff]
        %v994 = vmul.f32 %v991, %v919
        %v995 = vmul.f32 %v991, %v920
        %v996 = vmul.f32 %v994, 1.442695
        %v997 = vpow.pop %v996
        %v998 = vmul.f32 %v995, 1.442695
        %v999 = vpow.pop %v998
        %v1000 = vmul.f32 %v997, %v966
        %v1001 = vmul.f32 %v999, %v967
        %v1002 = vmul.f32 %v991, %v993
        %1003 = vset.pattern.permute.xlu0 1
        %1004 = vperm.xlu0 %1003, %v935
        %v1005 = vpop.permute.xlu0 %1004
        %1007 = vset.pattern.permute.xlu0 1
        %1008 = vperm.xlu0 %1007, %v936
        %v1009 = vpop.permute.xlu0 %1008
        %v1011 = vmul.f32 %v1002, %v1005
        %v1012 = vmul.f32 %v1002, %v1009
        %v1013 = vadd.f32 %v1000, %v1011
        %v1014 = vadd.f32 %v1001, %v1012
        %1015 = vset.pattern.permute.xlu0 1
        %1016 = vperm.xlu0 %1015, %v939
        %v1017 = vpop.permute.xlu0 %1016
        %1019 = vset.pattern.permute.xlu0 1
        %1020 = vperm.xlu0 %1019, %v940
        %v1021 = vpop.permute.xlu0 %1020
        %v1023 = vmul.f32 %v1013, %v1017
        %v1024 = vmul.f32 %v1014, %v1021
        %v1025 = vsel %vm559, %v1023, 0.0
        %v1026 = vsel %vm559, %v1024, 0.0
        %v1027 = vadd.f32 %v1025, %v1026
        %v1028 = vrot.slane %v1027, 4
        %v1029 = vadd.f32 %v1027, %v1028
        %v1030 = vrot.slane %v1029, 2
        %v1031 = vadd.f32 %v1029, %v1030
        %v1032 = vrot.slane %v1031, 1
        %v1033 = vadd.f32 %v1031, %v1032
        %s1034 = sadd.s32 %s932, 2
        %s1035 = scalar_lea.vmem [#allocation4], %s1034
        %v1036 = vld [vmem:[%s1035] ss:$0 sm:$0xff]
        %s1037 = scalar_lea.vmem [#allocation3], %s1034
        %v1038 = vld [vmem:[%s1037] ss:$0 sm:$0xff]
        %v1039 = vmul.f32 %v1036, %v919
        %v1040 = vmul.f32 %v1036, %v920
        %v1041 = vmul.f32 %v1039, 1.442695
        %v1042 = vpow.pop %v1041
        %v1043 = vmul.f32 %v1040, 1.442695
        %v1044 = vpow.pop %v1043
        %v1045 = vmul.f32 %v1042, %v1013
        %v1046 = vmul.f32 %v1044, %v1014
        %v1047 = vmul.f32 %v1036, %v1038
        %1048 = vset.pattern.permute.xlu0 2
        %1049 = vperm.xlu0 %1048, %v935
        %v1050 = vpop.permute.xlu0 %1049
        %1052 = vset.pattern.permute.xlu0 2
        %1053 = vperm.xlu0 %1052, %v936
        %v1054 = vpop.permute.xlu0 %1053
        %v1056 = vmul.f32 %v1047, %v1050
        %v1057 = vmul.f32 %v1047, %v1054
        %v1058 = vadd.f32 %v1045, %v1056
        %v1059 = vadd.f32 %v1046, %v1057
        %1060 = vset.pattern.permute.xlu0 2
        %1061 = vperm.xlu0 %1060, %v939
        %v1062 = vpop.permute.xlu0 %1061
        %1064 = vset.pattern.permute.xlu0 2
        %1065 = vperm.xlu0 %1064, %v940
        %v1066 = vpop.permute.xlu0 %1065
        %v1068 = vmul.f32 %v1058, %v1062
        %v1069 = vmul.f32 %v1059, %v1066
        %v1070 = vsel %vm559, %v1068, 0.0
        %v1071 = vsel %vm559, %v1069, 0.0
        %v1072 = vadd.f32 %v1070, %v1071
        %v1073 = vrot.slane %v1072, 4
        %v1074 = vadd.f32 %v1072, %v1073
        %v1075 = vrot.slane %v1074, 2
        %v1076 = vadd.f32 %v1074, %v1075
        %v1077 = vrot.slane %v1076, 1
        %v1078 = vadd.f32 %v1076, %v1077
        %s1079 = sadd.s32 %s932, 3
        %s1080 = scalar_lea.vmem [#allocation4], %s1079
        %v1081 = vld [vmem:[%s1080] ss:$0 sm:$0xff]
        %s1082 = scalar_lea.vmem [#allocation3], %s1079
        %v1083 = vld [vmem:[%s1082] ss:$0 sm:$0xff]
        %v1084 = vmul.f32 %v1081, %v919
        %v1085 = vmul.f32 %v1081, %v920
        %v1086 = vmul.f32 %v1084, 1.442695
        %v1087 = vpow.pop %v1086
        %v1088 = vmul.f32 %v1085, 1.442695
        %v1089 = vpow.pop %v1088
        %v1090 = vmul.f32 %v1087, %v1058
        %v1091 = vmul.f32 %v1089, %v1059
        %v1092 = vmul.f32 %v1081, %v1083
        %1093 = vset.pattern.permute.xlu0 3
        %1094 = vperm.xlu0 %1093, %v935
        %v1095 = vpop.permute.xlu0 %1094
        %1097 = vset.pattern.permute.xlu0 3
        %1098 = vperm.xlu0 %1097, %v936
        %v1099 = vpop.permute.xlu0 %1098
        %v1101 = vmul.f32 %v1092, %v1095
        %v1102 = vmul.f32 %v1092, %v1099
        %v1103 = vadd.f32 %v1090, %v1101
        %v1104 = vadd.f32 %v1091, %v1102
        %1105 = vset.pattern.permute.xlu0 3
        %1106 = vperm.xlu0 %1105, %v939
        %v1107 = vpop.permute.xlu0 %1106
        %1109 = vset.pattern.permute.xlu0 3
        %1110 = vperm.xlu0 %1109, %v940
        %v1111 = vpop.permute.xlu0 %1110
        %v1113 = vmul.f32 %v1103, %v1107
        %v1114 = vmul.f32 %v1104, %v1111
        %v1115 = vsel %vm559, %v1113, 0.0
        %v1116 = vsel %vm559, %v1114, 0.0
        %v1117 = vadd.f32 %v1115, %v1116
        %v1118 = vrot.slane %v1117, 4
        %v1119 = vadd.f32 %v1117, %v1118
        %v1120 = vrot.slane %v1119, 2
        %v1121 = vadd.f32 %v1119, %v1120
        %v1122 = vrot.slane %v1121, 1
        %v1123 = vadd.f32 %v1121, %v1122
        %s1124 = sadd.s32 %s932, 4
        %s1125 = scalar_lea.vmem [#allocation4], %s1124
        %v1126 = vld [vmem:[%s1125] ss:$0 sm:$0xff]
        %s1127 = scalar_lea.vmem [#allocation3], %s1124
        %v1128 = vld [vmem:[%s1127] ss:$0 sm:$0xff]
        %v1129 = vmul.f32 %v1126, %v919
        %v1130 = vmul.f32 %v1126, %v920
        %v1131 = vmul.f32 %v1129, 1.442695
        %v1132 = vpow.pop %v1131
        %v1133 = vmul.f32 %v1130, 1.442695
        %v1134 = vpow.pop %v1133
        %v1135 = vmul.f32 %v1132, %v1103
        %v1136 = vmul.f32 %v1134, %v1104
        %v1137 = vmul.f32 %v1126, %v1128
        %1138 = vset.pattern.permute.xlu0 4
        %1139 = vperm.xlu0 %1138, %v935
        %v1140 = vpop.permute.xlu0 %1139
        %1142 = vset.pattern.permute.xlu0 4
        %1143 = vperm.xlu0 %1142, %v936
        %v1144 = vpop.permute.xlu0 %1143
        %v1146 = vmul.f32 %v1137, %v1140
        %v1147 = vmul.f32 %v1137, %v1144
        %v1148 = vadd.f32 %v1135, %v1146
        %v1149 = vadd.f32 %v1136, %v1147
        %1150 = vset.pattern.permute.xlu0 4
        %1151 = vperm.xlu0 %1150, %v939
        %v1152 = vpop.permute.xlu0 %1151
        %1154 = vset.pattern.permute.xlu0 4
        %1155 = vperm.xlu0 %1154, %v940
        %v1156 = vpop.permute.xlu0 %1155
        %v1158 = vmul.f32 %v1148, %v1152
        %v1159 = vmul.f32 %v1149, %v1156
        %v1160 = vsel %vm559, %v1158, 0.0
        %v1161 = vsel %vm559, %v1159, 0.0
        %v1162 = vadd.f32 %v1160, %v1161
        %v1163 = vrot.slane %v1162, 4
        %v1164 = vadd.f32 %v1162, %v1163
        %v1165 = vrot.slane %v1164, 2
        %v1166 = vadd.f32 %v1164, %v1165
        %v1167 = vrot.slane %v1166, 1
        %v1168 = vadd.f32 %v1166, %v1167
        %s1169 = sadd.s32 %s932, 5
        %s1170 = scalar_lea.vmem [#allocation4], %s1169
        %v1171 = vld [vmem:[%s1170] ss:$0 sm:$0xff]
        %s1172 = scalar_lea.vmem [#allocation3], %s1169
        %v1173 = vld [vmem:[%s1172] ss:$0 sm:$0xff]
        %v1174 = vmul.f32 %v1171, %v919
        %v1175 = vmul.f32 %v1171, %v920
        %v1176 = vmul.f32 %v1174, 1.442695
        %v1177 = vpow.pop %v1176
        %v1178 = vmul.f32 %v1175, 1.442695
        %v1179 = vpow.pop %v1178
        %v1180 = vmul.f32 %v1177, %v1148
        %v1181 = vmul.f32 %v1179, %v1149
        %v1182 = vmul.f32 %v1171, %v1173
        %1183 = vset.pattern.permute.xlu0 5
        %1184 = vperm.xlu0 %1183, %v935
        %v1185 = vpop.permute.xlu0 %1184
        %1187 = vset.pattern.permute.xlu0 5
        %1188 = vperm.xlu0 %1187, %v936
        %v1189 = vpop.permute.xlu0 %1188
        %v1191 = vmul.f32 %v1182, %v1185
        %v1192 = vmul.f32 %v1182, %v1189
        %v1193 = vadd.f32 %v1180, %v1191
        %v1194 = vadd.f32 %v1181, %v1192
        %1195 = vset.pattern.permute.xlu0 5
        %1196 = vperm.xlu0 %1195, %v939
        %v1197 = vpop.permute.xlu0 %1196
        %1199 = vset.pattern.permute.xlu0 5
        %1200 = vperm.xlu0 %1199, %v940
        %v1201 = vpop.permute.xlu0 %1200
        %v1203 = vmul.f32 %v1193, %v1197
        %v1204 = vmul.f32 %v1194, %v1201
        %v1205 = vsel %vm559, %v1203, 0.0
        %v1206 = vsel %vm559, %v1204, 0.0
        %v1207 = vadd.f32 %v1205, %v1206
        %v1208 = vrot.slane %v1207, 4
        %v1209 = vadd.f32 %v1207, %v1208
        %v1210 = vrot.slane %v1209, 2
        %v1211 = vadd.f32 %v1209, %v1210
        %v1212 = vrot.slane %v1211, 1
        %v1213 = vadd.f32 %v1211, %v1212
        %s1214 = sadd.s32 %s932, 6
        %s1215 = scalar_lea.vmem [#allocation4], %s1214
        %v1216 = vld [vmem:[%s1215] ss:$0 sm:$0xff]
        %s1217 = scalar_lea.vmem [#allocation3], %s1214
        %v1218 = vld [vmem:[%s1217] ss:$0 sm:$0xff]
        %v1219 = vmul.f32 %v1216, %v919
        %v1220 = vmul.f32 %v1216, %v920
        %v1221 = vmul.f32 %v1219, 1.442695
        %v1222 = vpow.pop %v1221
        %v1223 = vmul.f32 %v1220, 1.442695
        %v1224 = vpow.pop %v1223
        %v1225 = vmul.f32 %v1222, %v1193
        %v1226 = vmul.f32 %v1224, %v1194
        %v1227 = vmul.f32 %v1216, %v1218
        %1228 = vset.pattern.permute.xlu0 6
        %1229 = vperm.xlu0 %1228, %v935
        %v1230 = vpop.permute.xlu0 %1229
        %1232 = vset.pattern.permute.xlu0 6
        %1233 = vperm.xlu0 %1232, %v936
        %v1234 = vpop.permute.xlu0 %1233
        %v1236 = vmul.f32 %v1227, %v1230
        %v1237 = vmul.f32 %v1227, %v1234
        %v1238 = vadd.f32 %v1225, %v1236
        %v1239 = vadd.f32 %v1226, %v1237
        %1240 = vset.pattern.permute.xlu0 6
        %1241 = vperm.xlu0 %1240, %v939
        %v1242 = vpop.permute.xlu0 %1241
        %1244 = vset.pattern.permute.xlu0 6
        %1245 = vperm.xlu0 %1244, %v940
        %v1246 = vpop.permute.xlu0 %1245
        %v1248 = vmul.f32 %v1238, %v1242
        %v1249 = vmul.f32 %v1239, %v1246
        %v1250 = vsel %vm559, %v1248, 0.0
        %v1251 = vsel %vm559, %v1249, 0.0
        %v1252 = vadd.f32 %v1250, %v1251
        %v1253 = vrot.slane %v1252, 4
        %v1254 = vadd.f32 %v1252, %v1253
        %v1255 = vrot.slane %v1254, 2
        %v1256 = vadd.f32 %v1254, %v1255
        %v1257 = vrot.slane %v1256, 1
        %v1258 = vadd.f32 %v1256, %v1257
        %s1259 = sadd.s32 %s932, 7
        %s1260 = scalar_lea.vmem [#allocation4], %s1259
        %v1261 = vld [vmem:[%s1260] ss:$0 sm:$0xff]
        %s1262 = scalar_lea.vmem [#allocation3], %s1259
        %v1263 = vld [vmem:[%s1262] ss:$0 sm:$0xff]
        %v1264 = vmul.f32 %v1261, %v919
        %v1265 = vmul.f32 %v1261, %v920
        %v1266 = vmul.f32 %v1264, 1.442695
        %v1267 = vpow.pop %v1266
        %v1268 = vmul.f32 %v1265, 1.442695
        %v1269 = vpow.pop %v1268
        %v1270 = vmul.f32 %v1267, %v1238
        %v1271 = vmul.f32 %v1269, %v1239
        %v1272 = vmul.f32 %v1261, %v1263
        %1273 = vset.pattern.permute.xlu0 7
        %1274 = vperm.xlu0 %1273, %v935
        %v1275 = vpop.permute.xlu0 %1274
        %1277 = vset.pattern.permute.xlu0 7
        %1278 = vperm.xlu0 %1277, %v936
        %v1279 = vpop.permute.xlu0 %1278
        %v1281 = vmul.f32 %v1272, %v1275
        %v1282 = vmul.f32 %v1272, %v1279
        %v1283 = vadd.f32 %v1270, %v1281
        %v1284 = vadd.f32 %v1271, %v1282
        %1285 = vset.pattern.permute.xlu0 7
        %1286 = vperm.xlu0 %1285, %v939
        %v1287 = vpop.permute.xlu0 %1286
        %1289 = vset.pattern.permute.xlu0 7
        %1290 = vperm.xlu0 %1289, %v940
        %v1291 = vpop.permute.xlu0 %1290
        %v1293 = vmul.f32 %v1283, %v1287
        %v1294 = vmul.f32 %v1284, %v1291
        %v1295 = vsel %vm559, %v1293, 0.0
        %v1296 = vsel %vm559, %v1294, 0.0
        %v1297 = vadd.f32 %v1295, %v1296
        %v1298 = vrot.slane %v1297, 4
        %v1299 = vadd.f32 %v1297, %v1298
        %v1300 = vrot.slane %v1299, 2
        %v1301 = vadd.f32 %v1299, %v1300
        %v1302 = vrot.slane %v1301, 1
        %v1303 = vadd.f32 %v1301, %v1302
        %vm1304 = vcmask 1040384
        %v1305 = vsel %vm1304, %v988, %v1033
        %vm1306 = vcmask 1041408
        %v1307 = vsel %vm1306, %v1305, %v1078
        %vm1308 = vcmask 1042432
        %v1309 = vsel %vm1308, %v1307, %v1123
        %vm1310 = vcmask 1043456
        %v1311 = vsel %vm1310, %v1309, %v1168
        %vm1312 = vcmask 1044480
        %v1313 = vsel %vm1312, %v1311, %v1213
        %vm1314 = vcmask 1045504
        %v1315 = vsel %vm1314, %v1313, %v1258
        %vm1316 = vcmask 1046528
        %v1317 = vsel %vm1316, %v1315, %v1303
        %v1318 = vld [vmem:[%s943] sm:$0xff]
        %s1319 = scalar_lea.vmem [#allocation6], %s932
        %v1320 = vld [vmem:[%s1319] sm:$0xff]
        %v1322 = vlaneseq
        %v1323 = vshrl.u32 %v1322, 7
        %v1324 = vsub.s32 0, %v1323
        %v1325 = vrot.slane %v921, %v1324
        %v1327 = vmul.f32 %v1318, %v1325
        %v1328 = vadd.f32 %v1317, %v1327
        %v1329 = vmul.f32 %v1328, %v1320
        %1330 = vst.msk [vmem:[%s1319] sm:$0xff] %vm559, %v1329
      $region85: #{tpu_custom_call.1} parent=71 // loop_footer
        %s929 = sadd.s32 1, %s925
      $region86: #{tpu_custom_call.1} parent=71 // loop_footer_branch
        %924 = sbr.rel target = $region82
      $region87: #{tpu_custom_call.1} parent=71 // loop_exit
        _
      %1331 = vst.msk [vmem:[#allocation7] sm:$0xff] %vm559, %v930
      %1332 = vst.msk [vmem:[#allocation7 + $0x8] sm:$0xff] %vm559, %v931
      %v1333 = vld [vmem:[#allocation6] sm:$0xff]
      %v1334 = vld [vmem:[#allocation6 + $0x8] sm:$0xff]
      %v1335 = vpack.c.bf16 %v1334, %v1333
      %v1336 = vld [vmem:[%s11] sm:$0xf]
      %v1337 = vld [vmem:[%s11 + $0x4] sm:$0xf]
      %v1338 = vld [vmem:[%s11 + $0x8] sm:$0xf]
      %v1339 = vld [vmem:[%s11 + $0xc] sm:$0xf]
      %v1340 = vld [vmem:[%s12] sm:$0x1]
      %v1342 = vlaneseq
      %v1343 = vshrl.u32 %v1342, 7
      %v1344 = vsub.s32 0, %v1343
      %v1345 = vrot.slane %v1340, %v1344
      %v1351 = vunpack.c.l.b16 %v1336
      %v1352 = vunpack.c.l.b16 %v1337
      %v1353 = vunpack.c.l.b16 %v1338
      %v1354 = vunpack.c.l.b16 %v1339
      %v1355 = vpack.c.b16 %v1352, %v1351
      %v1356 = vpack.c.b16 %v1354, %v1353
      %v1360 = vsel %vm559, %v1335, 0
      %1362 = vmatprep.subr.bf16.mxu0 0
      %1363 = vmatpush1.bf16.msra.mxu0 0
      %1364 = vmatprep.subr.bf16.mxu0 0
      %1365 = vmatpush1.bf16.msra.mxu0 0
      %1366 = vmatprep.subr.bf16.mxu0 0
      %1367 = vmatpush1.bf16.msra.mxu0 0
      %1368 = vmatprep.subr.bf16.mxu0 0
      %1369 = vmatpush1.bf16.msra.mxu0 0
      %1370 = vmatprep.subr.bf16.mxu0 0
      %1371 = vmatpush1.bf16.msra.mxu0 0
      %1372 = vmatprep.subr.bf16.mxu0 0
      %1373 = vmatpush1.bf16.msra.mxu0 0
      %1374 = vmatprep.subr.bf16.mxu0 0
      %1375 = vmatpush1.bf16.msra.mxu0 %v1356
      %1376 = vmatprep.subr.bf16.mxu0 0
      %1377 = vmatpush1.bf16.msra.mxu0 %v1355
      %1378 = vmatprep.subr.bf16.mxu0 0
      %1379 = vmatpush2.bf16.msra.mxu0 0
      %1380 = vmatprep.subr.bf16.mxu0 0
      %1381 = vmatpush2.bf16.msra.mxu0 0
      %1382 = vmatprep.subr.bf16.mxu0 0
      %1383 = vmatpush2.bf16.msra.mxu0 0
      %1384 = vmatprep.subr.bf16.mxu0 0
      %1385 = vmatpush2.bf16.msra.mxu0 0
      %1386 = vmatprep.subr.bf16.mxu0 0
      %1387 = vmatpush2.bf16.msra.mxu0 0
      %1388 = vmatprep.subr.bf16.mxu0 0
      %1389 = vmatpush2.bf16.msra.mxu0 0
      %1390 = vmatprep.subr.bf16.mxu0 0
      %1391 = vmatpush2.bf16.msra.mxu0 0
      %1392 = vmatprep.subr.bf16.mxu0 0
      %1393 = vmatpush2.bf16.msra.mxu0 0
      %1394 = vmatprep.mubr.bf16.mxu0 0
      %1395 = vmatmul.mubr.bf16.gmra.mxu0 %v1360
      %v1396 = vpop.f32.mrf.mxu0
      %v1397 = vadd.f32 %v1345, %v1396
      %v1398 = vpop.f32.mrf.mxu0
      %v1399 = vpop.f32.mrf.mxu0
      %v1400 = vadd.f32 %v1345, %v1399
      %v1401 = vpop.f32.mrf.mxu0
      %1402 = vdwg.mxu0
      %1403 = vst.msk [vmem:[%s478] sm:$0xff] %vm514, %v1397
      %1404 = vst.msk [vmem:[%s478 + $0x8] sm:$0xff] %vm514, %v1400
      %s1405 = smul.u32 2, %s29
      %p1406 = scmp.lt.s32.totalorder %s28, 1
      %s1407 = scalar_select %p1406, %s28, 1
      %p1408 = scmp.lt.s32.totalorder %s1405, 3
      %s1409 = scalar_select %p1408, %s1405, 3
      %s1410 = smul.addr %s1407, 4
      %s1411 = sadd.s32 %s1409, %s1410
      %s1412 = smul.addr %s1411, 8
      %s1413 = scalar_lea.vmem %s13, %s1412
      // Predicated region
      $region88: #{tpu_custom_call.1} parent=71 // pred_check
        %p1414 = pneg %p336
      $region89: #{tpu_custom_call.1} parent=71 // pred_check_branch
        %1416 = sbr.rel (%p1414) target = $region91
      $region90: #{tpu_custom_call.1} parent=71 // pred_region
        %s1417 = smul.u32 2, %s29
      $region91: #{tpu_custom_call.1} parent=71 // pred_fallthru
        _
    $region72: #{tpu_custom_call.1} parent=5 // pred_fallthru
      _
    %p1418 = scmp.le.s32.totalorder 2, %s19
    // Predicated region
    $region92: #{tpu_custom_call.1} parent=5 // pred_check
      %p1419 = pneg %p1418
    $region93: #{tpu_custom_call.1} parent=5 // pred_check_branch
      %1421 = sbr.rel (%p1419) target = $region95
    $region94: #{tpu_custom_call.1} parent=5 // pred_region
      %s1422 = ssub.s32 %s19, 2
      // Predicated region
      $region96: #{tpu_custom_call.1} parent=94 // pred_check
        %p1423 = pneg %p342
      $region97: #{tpu_custom_call.1} parent=94 // pred_check_branch
        %1425 = sbr.rel (%p1423) target = $region99
      $region98: #{tpu_custom_call.1} parent=94 // pred_region
        %s1426 = smul.u32 2, %s31
        %p1427 = scmp.lt.s32.totalorder %s30, 1
        %s1428 = scalar_select %p1427, %s30, 1
        %p1429 = scmp.lt.s32.totalorder %s1426, 3
        %s1430 = scalar_select %p1429, %s1426, 3
        %s1431 = smul.addr %s1428, 4
        %s1432 = sadd.s32 %s1430, %s1431
        %s1433 = smul.addr %s1432, 8
        %s1434 = scalar_lea.vmem %s13, %s1433
      $region99: #{tpu_custom_call.1} parent=94 // pred_fallthru
        _
    $region95: #{tpu_custom_call.1} parent=5 // pred_fallthru
      _
  $region6: #{tpu_custom_call.1} parent=0 // loop_footer
    %s23 = sadd.s32 1, %s19
  $region7: #{tpu_custom_call.1} parent=0 // loop_footer_branch
    %18 = sbr.rel target = $region3
  $region8: #{tpu_custom_call.1} parent=0 // loop_exit
    _

</llo_original>
